<compile_context>
chip_gen: v5e
topology: v5e:2x2
jax: 0.10.0
libtpu: 0.0.40
codegen_flags: <defaults>
</compile_context>

<pallas_src>
import jax
import jax.numpy as jnp
from jax.experimental import pallas as pl
from jax.experimental.pallas import tpu as pltpu

# PolicyNetwork hyper-parameters (fixed by the PyTorch module).
K1, S1, C1 = 8, 4, 32      # conv1: kernel, stride, out channels (in channels = 3)
K2, S2, C2 = 4, 2, 64      # conv2
K3, S3, C3 = 3, 1, 64      # conv3
FC1 = 512                  # fc1 width
HEAD_PAD = 128             # mean/std head columns padded to one full lane group
BATCH_TILE = 8             # batch rows per spatial position padded to a sublane group


def _conv_out(s, k, stride):
    return (s - k) // stride + 1


def feature_size(h, w):
    h, w = _conv_out(h, K1, S1), _conv_out(w, K1, S1)
    h, w = _conv_out(h, K2, S2), _conv_out(w, K2, S2)
    h, w = _conv_out(h, K3, S3), _conv_out(w, K3, S3)
    return C3 * h * w


# ----------------------------------------------------------------------------
# Fused forward kernel (built for static shapes)
# ----------------------------------------------------------------------------
def _make_fused_kernel(BP, OH1, OW1, action_space, head_pad):
    """Conv activations are kept as 2-D (spatial_position*BP, channels) values
    with rows ordered (oh, ow, b); BP is a multiple of 8, so the row group of
    one spatial position is a whole, aligned sublane group and every im2col
    gather below is a plain static slice."""
    OH2, OW2 = _conv_out(OH1, K2, S2), _conv_out(OW1, K2, S2)
    OH3, OW3 = _conv_out(OH2, K3, S3), _conv_out(OW2, K3, S3)
    # TODO(synk): generalize the fc1 feature regroup for conv3 outputs with
    # spatial extent > 1x1 (torch flattens NCHW, i.e. channel-major); for the
    # geometry used here the conv3 output is 1x1, so the regroup is a no-op.
    assert OH3 == 1 and OW3 == 1, "fused kernel assumes a 1x1 conv3 output"
    assert 2 * action_space <= head_pad
    assert BP % BATCH_TILE == 0
    A = action_space
    f32, bf16 = jnp.float32, jnp.bfloat16

    def kernel(p1_ref, w1_ref, b1_ref, w2_ref, b2_ref, w3_ref, b3_ref,
               wf_ref, bf_ref, wh_ref, bh_ref, o_ref):
        # ---- conv1: one (OH1*OW1*BP, 3*K1*K1) x (3*K1*K1, C1) MXU matmul ----
        p1 = p1_ref[...].astype(bf16)                     # single in-kernel cast
        a1 = jnp.dot(p1, w1_ref[...], preferred_element_type=f32)
        a1 = jnp.maximum(a1 + b1_ref[...], 0.0).astype(bf16)   # cast ONCE, (oh1,ow1,b)

        # Aligned (BP, C1) row group of the conv1 output per spatial position.
        rows1 = [a1[p * BP:(p + 1) * BP, :] for p in range(OH1 * OW1)]

        # ---- conv2: assemble ONE (OH2*OW2*BP, K2*K2*C1) LHS, ONE matmul ------
        # Row block q = (oh2, ow2); lane order (kh, kw, cin) matches conv2_w rows.
        patches2 = []
        for oh2 in range(OH2):
            for ow2 in range(OW2):
                pieces = [rows1[(S2 * oh2 + kh) * OW1 + (S2 * ow2 + kw)]
                          for kh in range(K2) for kw in range(K2)]
                patches2.append(jnp.concatenate(pieces, axis=1))   # (BP, K2*K2*C1)
        p2 = jnp.concatenate(patches2, axis=0)            # (OH2*OW2*BP, K2*K2*C1)
        a2 = jnp.dot(p2, w2_ref[...], preferred_element_type=f32)
        a2 = jnp.maximum(a2 + b2_ref[...], 0.0).astype(bf16)      # (OH2*OW2*BP, C2)

        # ---- conv3: its 3x3 window covers the whole conv2 map (1x1 output),
        # so the patch is the per-batch (kh, kw, cin)-ordered flatten.
        x3 = jnp.concatenate([a2[q * BP:(q + 1) * BP, :]
                              for q in range(OH2 * OW2)], axis=1)  # (BP, OH2*OW2*C2)
        a3 = jnp.dot(x3, w3_ref[...], preferred_element_type=f32)
        a3 = jnp.maximum(a3 + b3_ref[...], 0.0).astype(bf16)      # (BP, C3)

        # ---- fc1 -------------------------------------------------------------
        h = jnp.dot(a3, wf_ref[...], preferred_element_type=f32)
        h = jnp.maximum(h + bf_ref[...], 0.0).astype(bf16)        # (BP, FC1)

        # ---- merged mean/std heads, lane-dense (head_pad = 128) output -------
        heads = jnp.dot(h, wh_ref[...], preferred_element_type=f32)
        heads = heads + bh_ref[...]                                # (BP, head_pad) f32
        col = jax.lax.broadcasted_iota(jnp.int32, heads.shape, 1)
        is_std = jnp.logical_and(col >= A, col < 2 * A)
        # std columns: exp(clamp(x, -20, 2)); mean / padding columns: identity.
        o_ref[...] = jnp.where(is_std, jnp.exp(jnp.clip(heads, -20.0, 2.0)), heads)

    return kernel


# ----------------------------------------------------------------------------
# Forward wrapper
# ----------------------------------------------------------------------------
def policy_network_forward(params, x, *, action_space):
    """x: (B, 3, H, W) float32 NCHW (PyTorch layout). Returns (mean, std)."""
    B, C, H, W = x.shape
    OH1, OW1 = _conv_out(H, K1, S1), _conv_out(W, K1, S1)
    OH2, OW2 = _conv_out(OH1, K2, S2), _conv_out(OW1, K2, S2)
    head_pad = params["head_w"].shape[1]
    BP = ((B + BATCH_TILE - 1) // BATCH_TILE) * BATCH_TILE

    # conv1 im2col as one fused XLA op.  The "HWNC" output spec produces the
    # kernel's (oh1, ow1, b, feat) order directly (feature order (cin, kh, kw),
    # matching the conv1_w rows), so no wrapper-side transpose is needed; the
    # reshape below is a free contiguous flatten and the bf16 cast is in-kernel.
    patches = jax.lax.conv_general_dilated_patches(
        x, filter_shape=(K1, K1), window_strides=(S1, S1), padding="VALID",
        dimension_numbers=("NCHW", "OIHW", "HWNC"))      # (OH1, OW1, B, 3*K1*K1)
    if BP != B:
        # Zero-fill pad batch rows so every per-position row group is a full
        # sublane group; pad rows stay finite and are sliced off below.
        patches = jnp.pad(patches, ((0, 0), (0, 0), (0, BP - B), (0, 0)))
    p1 = patches.reshape(OH1 * OW1 * BP, C * K1 * K1)     # f32; cast in-kernel

    operands = (p1,
                params["conv1_w"], params["conv1_b"],
                params["conv2_w"], params["conv2_b"],
                params["conv3_w"], params["conv3_b"],
                params["fc1_w"], params["fc1_b"],
                params["head_w"], params["head_b"])

    flops = 2 * (OH1 * OW1 * BP * (C * K1 * K1) * C1
                 + OH2 * OW2 * BP * (K2 * K2 * C1) * C2
                 + BP * (K3 * K3 * C2) * C3
                 + BP * C3 * FC1
                 + BP * FC1 * head_pad)
    bytes_accessed = int(sum(a.size * a.dtype.itemsize for a in operands)
                         + BP * head_pad * 4)

    # TODO(synk): for batch sizes in the hundreds, add a leading grid axis over
    # batch tiles with dimension_semantics=("parallel",) to use v7x's 2nd core.
    out = pl.pallas_call(
        _make_fused_kernel(BP, OH1, OW1, action_space, head_pad),
        out_shape=jax.ShapeDtypeStruct((BP, head_pad), jnp.float32),
        in_specs=[pl.BlockSpec(memory_space=pltpu.MemorySpace.VMEM)] * len(operands),
        out_specs=pl.BlockSpec(memory_space=pltpu.MemorySpace.VMEM),
        cost_estimate=pl.CostEstimate(flops=int(flops),
                                      transcendentals=int(BP * head_pad),
                                      bytes_accessed=bytes_accessed),
    )(*operands)

    mean = out[:B, :action_space]
    std = out[:B, action_space:2 * action_space]
    return mean, std


# ----------------------------------------------------------------------------
# Parameters (kernel-ready layouts / dtypes)
# ----------------------------------------------------------------------------
def init_params(key, action_space, fc1_input_dim, head_pad=HEAD_PAD):
    """Random params in kernel-ready layout.

    Correspondence with the PyTorch module (for loading a checkpoint):
      conv1_w = conv1.weight.reshape(32, -1).T                       # (cin,kh,kw) rows
      conv2_w = conv2.weight.permute(2, 3, 1, 0).reshape(-1, 64)     # (kh,kw,cin) rows
      conv3_w = conv3.weight.permute(2, 3, 1, 0).reshape(-1, 64)     # (kh,kw,cin) rows
      fc1_w   = fc1.weight.T                                         # (in, 512)
      head_w[:, :A] = mean.weight.T ; head_w[:, A:2A] = std.weight.T # padded to 128
      biases are f32 row vectors (1, N); head_b laid out like head_w.
    Weights are bf16 (MXU-native); biases stay f32.
    """
    ks = jax.random.split(key, 12)

    def winit(k, shape, fan_in):
        return jax.random.normal(k, shape, jnp.float32) * (fan_in ** -0.5)

    A = action_space
    head_w = jnp.zeros((FC1, head_pad), jnp.float32)
    head_w = head_w.at[:, :A].set(winit(ks[8], (FC1, A), FC1))
    head_w = head_w.at[:, A:2 * A].set(winit(ks[10], (FC1, A), FC1))
    head_b = jnp.zeros((1, head_pad), jnp.float32)
    head_b = head_b.at[0, :A].set(winit(ks[9], (A,), FC1))
    head_b = head_b.at[0, A:2 * A].set(winit(ks[11], (A,), FC1))

    return {
        "conv1_w": winit(ks[0], (3 * K1 * K1, C1), 3 * K1 * K1).astype(jnp.bfloat16),
        "conv1_b": winit(ks[1], (1, C1), 3 * K1 * K1),
        "conv2_w": winit(ks[2], (K2 * K2 * C1, C2), C1 * K2 * K2).astype(jnp.bfloat16),
        "conv2_b": winit(ks[3], (1, C2), C1 * K2 * K2),
        "conv3_w": winit(ks[4], (K3 * K3 * C2, C3), C2 * K3 * K3).astype(jnp.bfloat16),
        "conv3_b": winit(ks[5], (1, C3), C2 * K3 * K3),
        "fc1_w": winit(ks[6], (fc1_input_dim, FC1), fc1_input_dim).astype(jnp.bfloat16),
        "fc1_b": winit(ks[7], (1, FC1), fc1_input_dim),
        "head_w": head_w.astype(jnp.bfloat16),
        "head_b": head_b,
    }


# ----------------------------------------------------------------------------
# Plain-JAX float32 reference (mirrors the PyTorch forward) for validation
# ----------------------------------------------------------------------------
def reference_forward(params, x, action_space):
    f32 = jnp.float32
    hi = jax.lax.Precision.HIGHEST
    A = action_space
    cin = params["conv1_w"].shape[0] // (K1 * K1)
    w1 = params["conv1_w"].astype(f32).T.reshape(C1, cin, K1, K1)     # OIHW
    w2 = params["conv2_w"].astype(f32).reshape(K2, K2, C1, C2)        # HWIO
    w3 = params["conv3_w"].astype(f32).reshape(K3, K3, C2, C3)        # HWIO

    y = jax.lax.conv_general_dilated(
        x, w1, (S1, S1), "VALID", dimension_numbers=("NCHW", "OIHW", "NCHW"),
        precision=hi)
    y = jax.nn.relu(y + params["conv1_b"].reshape(1, C1, 1, 1))
    y = jax.lax.conv_general_dilated(
        y, w2, (S2, S2), "VALID", dimension_numbers=("NCHW", "HWIO", "NCHW"),
        precision=hi)
    y = jax.nn.relu(y + params["conv2_b"].reshape(1, C2, 1, 1))
    y = jax.lax.conv_general_dilated(
        y, w3, (S3, S3), "VALID", dimension_numbers=("NCHW", "HWIO", "NCHW"),
        precision=hi)
    y = jax.nn.relu(y + params["conv3_b"].reshape(1, C3, 1, 1))
    feat = y.reshape(y.shape[0], -1)                     # NCHW flatten (torch .view)
    h = jax.nn.relu(jnp.dot(feat, params["fc1_w"].astype(f32), precision=hi)
                    + params["fc1_b"])
    wh = params["head_w"].astype(f32)
    bh = params["head_b"]
    mean = jnp.dot(h, wh[:, :A], precision=hi) + bh[:, :A]
    std = jnp.exp(jnp.clip(jnp.dot(h, wh[:, A:2 * A], precision=hi) + bh[:, A:2 * A],
                           -20.0, 2.0))
    return mean, std


if __name__ == "__main__":
    key = jax.random.PRNGKey(0)
    k_param, k_x = jax.random.split(key)

    # Small shapes consistent with the module: B=2, C=3, spatial 36x36
    # (36 -> conv1 -> 8 -> conv2 -> 3 -> conv3 -> 1, so fc1_input_dim = 64).
    B, C, H, W = 2, 3, 36, 36
    action_space = 4
    fc1_in = feature_size(H, W)
    assert fc1_in == C3                       # 1x1 conv3 output for this geometry

    params = init_params(k_param, action_space, fc1_in)
    x = jax.random.normal(k_x, (B, C, H, W), jnp.float32)

    fwd = jax.jit(policy_network_forward, static_argnames="action_space")
    mean, std = fwd(params, x, action_space=action_space)
    jax.block_until_ready(mean)
    jax.block_until_ready(std)

    assert mean.shape == (B, action_space)
    assert std.shape == (B, action_space)
    assert bool(jnp.all(std > 0.0))           # std = exp(clamped) must be > 0

    # Numerical self-check against a plain-JAX (non-Pallas) f32 reference;
    # the only expected deltas come from the bf16 MXU operands.
    mean_ref, std_ref = reference_forward(params, x, action_space)
    assert float(jnp.max(jnp.abs(mean - mean_ref))) < 1e-1
    assert float(jnp.max(jnp.abs(std - std_ref))) < 1e-1

    print("KERNEL_OK")
</pallas_src>

<mosaic_0001>
module attributes {stable_mosaic.version = 11 : i64} {
  func.func @kernel(%arg0: memref<512x192xf32, #tpu.memory_space<vmem>>, %arg1: memref<192x32xbf16, #tpu.memory_space<vmem>>, %arg2: memref<1x32xf32, #tpu.memory_space<vmem>>, %arg3: memref<512x64xbf16, #tpu.memory_space<vmem>>, %arg4: memref<1x64xf32, #tpu.memory_space<vmem>>, %arg5: memref<576x64xbf16, #tpu.memory_space<vmem>>, %arg6: memref<1x64xf32, #tpu.memory_space<vmem>>, %arg7: memref<64x512xbf16, #tpu.memory_space<vmem>>, %arg8: memref<1x512xf32, #tpu.memory_space<vmem>>, %arg9: memref<512x128xbf16, #tpu.memory_space<vmem>>, %arg10: memref<1x128xf32, #tpu.memory_space<vmem>>, %arg11: memref<8x128xf32, #tpu.memory_space<vmem>>) attributes {dimension_semantics = [], scalar_prefetch = 0 : i64, scratch_operands = 0 : i64, tpu.core_type = #tpu.core_type<tc>} {
    %c0 = arith.constant 0 : index
    %c0_0 = arith.constant 0 : index
    %0 = vector.load %arg0[%c0, %c0_0] : memref<512x192xf32, #tpu.memory_space<vmem>>, vector<512x192xf32>
    %1 = arith.truncf %0 : vector<512x192xf32> to vector<512x192xbf16>
    %c0_1 = arith.constant 0 : index
    %c0_2 = arith.constant 0 : index
    %2 = vector.load %arg1[%c0_1, %c0_2] : memref<192x32xbf16, #tpu.memory_space<vmem>>, vector<192x32xbf16>
    %cst = arith.constant dense<0.000000e+00> : vector<512x32xf32>
    %3 = tpu.matmul %1, %2, %cst {dimension_numbers = #tpu.dot_dimension_numbers<[1], [0], [0], [1], [0, 0, 1, 1], [], []>} : vector<512x192xbf16>, vector<192x32xbf16>, vector<512x32xf32> -> vector<512x32xf32>
    %c0_3 = arith.constant 0 : index
    %c0_4 = arith.constant 0 : index
    %4 = vector.load %arg2[%c0_3, %c0_4] : memref<1x32xf32, #tpu.memory_space<vmem>>, vector<1x32xf32>
    %5 = vector.broadcast %4 : vector<1x32xf32> to vector<512x32xf32>
    %6 = arith.addf %3, %5 : vector<512x32xf32>
    %cst_5 = arith.constant 0.000000e+00 : f32
    %7 = vector.broadcast %cst_5 : f32 to vector<512x32xf32>
    %8 = arith.maximumf %6, %7 : vector<512x32xf32>
    %9 = arith.truncf %8 : vector<512x32xf32> to vector<512x32xbf16>
    %10 = vector.extract_strided_slice %9 {offsets = [0, 0], sizes = [8, 32], strides = [1, 1]} : vector<512x32xbf16> to vector<8x32xbf16>
    %11 = vector.extract_strided_slice %9 {offsets = [8, 0], sizes = [8, 32], strides = [1, 1]} : vector<512x32xbf16> to vector<8x32xbf16>
    %12 = vector.extract_strided_slice %9 {offsets = [16, 0], sizes = [8, 32], strides = [1, 1]} : vector<512x32xbf16> to vector<8x32xbf16>
    %13 = vector.extract_strided_slice %9 {offsets = [24, 0], sizes = [8, 32], strides = [1, 1]} : vector<512x32xbf16> to vector<8x32xbf16>
    %14 = vector.extract_strided_slice %9 {offsets = [32, 0], sizes = [8, 32], strides = [1, 1]} : vector<512x32xbf16> to vector<8x32xbf16>
    %15 = vector.extract_strided_slice %9 {offsets = [40, 0], sizes = [8, 32], strides = [1, 1]} : vector<512x32xbf16> to vector<8x32xbf16>
    %16 = vector.extract_strided_slice %9 {offsets = [48, 0], sizes = [8, 32], strides = [1, 1]} : vector<512x32xbf16> to vector<8x32xbf16>
    %17 = vector.extract_strided_slice %9 {offsets = [56, 0], sizes = [8, 32], strides = [1, 1]} : vector<512x32xbf16> to vector<8x32xbf16>
    %18 = vector.extract_strided_slice %9 {offsets = [64, 0], sizes = [8, 32], strides = [1, 1]} : vector<512x32xbf16> to vector<8x32xbf16>
    %19 = vector.extract_strided_slice %9 {offsets = [72, 0], sizes = [8, 32], strides = [1, 1]} : vector<512x32xbf16> to vector<8x32xbf16>
    %20 = vector.extract_strided_slice %9 {offsets = [80, 0], sizes = [8, 32], strides = [1, 1]} : vector<512x32xbf16> to vector<8x32xbf16>
    %21 = vector.extract_strided_slice %9 {offsets = [88, 0], sizes = [8, 32], strides = [1, 1]} : vector<512x32xbf16> to vector<8x32xbf16>
    %22 = vector.extract_strided_slice %9 {offsets = [96, 0], sizes = [8, 32], strides = [1, 1]} : vector<512x32xbf16> to vector<8x32xbf16>
    %23 = vector.extract_strided_slice %9 {offsets = [104, 0], sizes = [8, 32], strides = [1, 1]} : vector<512x32xbf16> to vector<8x32xbf16>
    %24 = vector.extract_strided_slice %9 {offsets = [112, 0], sizes = [8, 32], strides = [1, 1]} : vector<512x32xbf16> to vector<8x32xbf16>
    %25 = vector.extract_strided_slice %9 {offsets = [120, 0], sizes = [8, 32], strides = [1, 1]} : vector<512x32xbf16> to vector<8x32xbf16>
    %26 = vector.extract_strided_slice %9 {offsets = [128, 0], sizes = [8, 32], strides = [1, 1]} : vector<512x32xbf16> to vector<8x32xbf16>
    %27 = vector.extract_strided_slice %9 {offsets = [136, 0], sizes = [8, 32], strides = [1, 1]} : vector<512x32xbf16> to vector<8x32xbf16>
    %28 = vector.extract_strided_slice %9 {offsets = [144, 0], sizes = [8, 32], strides = [1, 1]} : vector<512x32xbf16> to vector<8x32xbf16>
    %29 = vector.extract_strided_slice %9 {offsets = [152, 0], sizes = [8, 32], strides = [1, 1]} : vector<512x32xbf16> to vector<8x32xbf16>
    %30 = vector.extract_strided_slice %9 {offsets = [160, 0], sizes = [8, 32], strides = [1, 1]} : vector<512x32xbf16> to vector<8x32xbf16>
    %31 = vector.extract_strided_slice %9 {offsets = [168, 0], sizes = [8, 32], strides = [1, 1]} : vector<512x32xbf16> to vector<8x32xbf16>
    %32 = vector.extract_strided_slice %9 {offsets = [176, 0], sizes = [8, 32], strides = [1, 1]} : vector<512x32xbf16> to vector<8x32xbf16>
    %33 = vector.extract_strided_slice %9 {offsets = [184, 0], sizes = [8, 32], strides = [1, 1]} : vector<512x32xbf16> to vector<8x32xbf16>
    %34 = vector.extract_strided_slice %9 {offsets = [192, 0], sizes = [8, 32], strides = [1, 1]} : vector<512x32xbf16> to vector<8x32xbf16>
    %35 = vector.extract_strided_slice %9 {offsets = [200, 0], sizes = [8, 32], strides = [1, 1]} : vector<512x32xbf16> to vector<8x32xbf16>
    %36 = vector.extract_strided_slice %9 {offsets = [208, 0], sizes = [8, 32], strides = [1, 1]} : vector<512x32xbf16> to vector<8x32xbf16>
    %37 = vector.extract_strided_slice %9 {offsets = [216, 0], sizes = [8, 32], strides = [1, 1]} : vector<512x32xbf16> to vector<8x32xbf16>
    %38 = vector.extract_strided_slice %9 {offsets = [224, 0], sizes = [8, 32], strides = [1, 1]} : vector<512x32xbf16> to vector<8x32xbf16>
    %39 = vector.extract_strided_slice %9 {offsets = [232, 0], sizes = [8, 32], strides = [1, 1]} : vector<512x32xbf16> to vector<8x32xbf16>
    %40 = vector.extract_strided_slice %9 {offsets = [240, 0], sizes = [8, 32], strides = [1, 1]} : vector<512x32xbf16> to vector<8x32xbf16>
    %41 = vector.extract_strided_slice %9 {offsets = [248, 0], sizes = [8, 32], strides = [1, 1]} : vector<512x32xbf16> to vector<8x32xbf16>
    %42 = vector.extract_strided_slice %9 {offsets = [256, 0], sizes = [8, 32], strides = [1, 1]} : vector<512x32xbf16> to vector<8x32xbf16>
    %43 = vector.extract_strided_slice %9 {offsets = [264, 0], sizes = [8, 32], strides = [1, 1]} : vector<512x32xbf16> to vector<8x32xbf16>
    %44 = vector.extract_strided_slice %9 {offsets = [272, 0], sizes = [8, 32], strides = [1, 1]} : vector<512x32xbf16> to vector<8x32xbf16>
    %45 = vector.extract_strided_slice %9 {offsets = [280, 0], sizes = [8, 32], strides = [1, 1]} : vector<512x32xbf16> to vector<8x32xbf16>
    %46 = vector.extract_strided_slice %9 {offsets = [288, 0], sizes = [8, 32], strides = [1, 1]} : vector<512x32xbf16> to vector<8x32xbf16>
    %47 = vector.extract_strided_slice %9 {offsets = [296, 0], sizes = [8, 32], strides = [1, 1]} : vector<512x32xbf16> to vector<8x32xbf16>
    %48 = vector.extract_strided_slice %9 {offsets = [304, 0], sizes = [8, 32], strides = [1, 1]} : vector<512x32xbf16> to vector<8x32xbf16>
    %49 = vector.extract_strided_slice %9 {offsets = [312, 0], sizes = [8, 32], strides = [1, 1]} : vector<512x32xbf16> to vector<8x32xbf16>
    %50 = vector.extract_strided_slice %9 {offsets = [320, 0], sizes = [8, 32], strides = [1, 1]} : vector<512x32xbf16> to vector<8x32xbf16>
    %51 = vector.extract_strided_slice %9 {offsets = [328, 0], sizes = [8, 32], strides = [1, 1]} : vector<512x32xbf16> to vector<8x32xbf16>
    %52 = vector.extract_strided_slice %9 {offsets = [336, 0], sizes = [8, 32], strides = [1, 1]} : vector<512x32xbf16> to vector<8x32xbf16>
    %53 = vector.extract_strided_slice %9 {offsets = [344, 0], sizes = [8, 32], strides = [1, 1]} : vector<512x32xbf16> to vector<8x32xbf16>
    %54 = vector.extract_strided_slice %9 {offsets = [352, 0], sizes = [8, 32], strides = [1, 1]} : vector<512x32xbf16> to vector<8x32xbf16>
    %55 = vector.extract_strided_slice %9 {offsets = [360, 0], sizes = [8, 32], strides = [1, 1]} : vector<512x32xbf16> to vector<8x32xbf16>
    %56 = vector.extract_strided_slice %9 {offsets = [368, 0], sizes = [8, 32], strides = [1, 1]} : vector<512x32xbf16> to vector<8x32xbf16>
    %57 = vector.extract_strided_slice %9 {offsets = [376, 0], sizes = [8, 32], strides = [1, 1]} : vector<512x32xbf16> to vector<8x32xbf16>
    %58 = vector.extract_strided_slice %9 {offsets = [384, 0], sizes = [8, 32], strides = [1, 1]} : vector<512x32xbf16> to vector<8x32xbf16>
    %59 = vector.extract_strided_slice %9 {offsets = [392, 0], sizes = [8, 32], strides = [1, 1]} : vector<512x32xbf16> to vector<8x32xbf16>
    %60 = vector.extract_strided_slice %9 {offsets = [400, 0], sizes = [8, 32], strides = [1, 1]} : vector<512x32xbf16> to vector<8x32xbf16>
    %61 = vector.extract_strided_slice %9 {offsets = [408, 0], sizes = [8, 32], strides = [1, 1]} : vector<512x32xbf16> to vector<8x32xbf16>
    %62 = vector.extract_strided_slice %9 {offsets = [416, 0], sizes = [8, 32], strides = [1, 1]} : vector<512x32xbf16> to vector<8x32xbf16>
    %63 = vector.extract_strided_slice %9 {offsets = [424, 0], sizes = [8, 32], strides = [1, 1]} : vector<512x32xbf16> to vector<8x32xbf16>
    %64 = vector.extract_strided_slice %9 {offsets = [432, 0], sizes = [8, 32], strides = [1, 1]} : vector<512x32xbf16> to vector<8x32xbf16>
    %65 = vector.extract_strided_slice %9 {offsets = [440, 0], sizes = [8, 32], strides = [1, 1]} : vector<512x32xbf16> to vector<8x32xbf16>
    %66 = vector.extract_strided_slice %9 {offsets = [448, 0], sizes = [8, 32], strides = [1, 1]} : vector<512x32xbf16> to vector<8x32xbf16>
    %67 = vector.extract_strided_slice %9 {offsets = [456, 0], sizes = [8, 32], strides = [1, 1]} : vector<512x32xbf16> to vector<8x32xbf16>
    %68 = vector.extract_strided_slice %9 {offsets = [464, 0], sizes = [8, 32], strides = [1, 1]} : vector<512x32xbf16> to vector<8x32xbf16>
    %69 = vector.extract_strided_slice %9 {offsets = [472, 0], sizes = [8, 32], strides = [1, 1]} : vector<512x32xbf16> to vector<8x32xbf16>
    %70 = vector.extract_strided_slice %9 {offsets = [480, 0], sizes = [8, 32], strides = [1, 1]} : vector<512x32xbf16> to vector<8x32xbf16>
    %71 = vector.extract_strided_slice %9 {offsets = [488, 0], sizes = [8, 32], strides = [1, 1]} : vector<512x32xbf16> to vector<8x32xbf16>
    %72 = vector.extract_strided_slice %9 {offsets = [496, 0], sizes = [8, 32], strides = [1, 1]} : vector<512x32xbf16> to vector<8x32xbf16>
    %73 = vector.extract_strided_slice %9 {offsets = [504, 0], sizes = [8, 32], strides = [1, 1]} : vector<512x32xbf16> to vector<8x32xbf16>
    %74 = tpu.concatenate %10, %11, %12, %13, %18, %19, %20, %21, %26, %27, %28, %29, %34, %35, %36, %37 in 1 : vector<8x32xbf16>, vector<8x32xbf16>, vector<8x32xbf16>, vector<8x32xbf16>, vector<8x32xbf16>, vector<8x32xbf16>, vector<8x32xbf16>, vector<8x32xbf16>, vector<8x32xbf16>, vector<8x32xbf16>, vector<8x32xbf16>, vector<8x32xbf16>, vector<8x32xbf16>, vector<8x32xbf16>, vector<8x32xbf16>, vector<8x32xbf16> -> vector<8x512xbf16>
    %75 = tpu.concatenate %12, %13, %14, %15, %20, %21, %22, %23, %28, %29, %30, %31, %36, %37, %38, %39 in 1 : vector<8x32xbf16>, vector<8x32xbf16>, vector<8x32xbf16>, vector<8x32xbf16>, vector<8x32xbf16>, vector<8x32xbf16>, vector<8x32xbf16>, vector<8x32xbf16>, vector<8x32xbf16>, vector<8x32xbf16>, vector<8x32xbf16>, vector<8x32xbf16>, vector<8x32xbf16>, vector<8x32xbf16>, vector<8x32xbf16>, vector<8x32xbf16> -> vector<8x512xbf16>
    %76 = tpu.concatenate %14, %15, %16, %17, %22, %23, %24, %25, %30, %31, %32, %33, %38, %39, %40, %41 in 1 : vector<8x32xbf16>, vector<8x32xbf16>, vector<8x32xbf16>, vector<8x32xbf16>, vector<8x32xbf16>, vector<8x32xbf16>, vector<8x32xbf16>, vector<8x32xbf16>, vector<8x32xbf16>, vector<8x32xbf16>, vector<8x32xbf16>, vector<8x32xbf16>, vector<8x32xbf16>, vector<8x32xbf16>, vector<8x32xbf16>, vector<8x32xbf16> -> vector<8x512xbf16>
    %77 = tpu.concatenate %26, %27, %28, %29, %34, %35, %36, %37, %42, %43, %44, %45, %50, %51, %52, %53 in 1 : vector<8x32xbf16>, vector<8x32xbf16>, vector<8x32xbf16>, vector<8x32xbf16>, vector<8x32xbf16>, vector<8x32xbf16>, vector<8x32xbf16>, vector<8x32xbf16>, vector<8x32xbf16>, vector<8x32xbf16>, vector<8x32xbf16>, vector<8x32xbf16>, vector<8x32xbf16>, vector<8x32xbf16>, vector<8x32xbf16>, vector<8x32xbf16> -> vector<8x512xbf16>
    %78 = tpu.concatenate %28, %29, %30, %31, %36, %37, %38, %39, %44, %45, %46, %47, %52, %53, %54, %55 in 1 : vector<8x32xbf16>, vector<8x32xbf16>, vector<8x32xbf16>, vector<8x32xbf16>, vector<8x32xbf16>, vector<8x32xbf16>, vector<8x32xbf16>, vector<8x32xbf16>, vector<8x32xbf16>, vector<8x32xbf16>, vector<8x32xbf16>, vector<8x32xbf16>, vector<8x32xbf16>, vector<8x32xbf16>, vector<8x32xbf16>, vector<8x32xbf16> -> vector<8x512xbf16>
    %79 = tpu.concatenate %30, %31, %32, %33, %38, %39, %40, %41, %46, %47, %48, %49, %54, %55, %56, %57 in 1 : vector<8x32xbf16>, vector<8x32xbf16>, vector<8x32xbf16>, vector<8x32xbf16>, vector<8x32xbf16>, vector<8x32xbf16>, vector<8x32xbf16>, vector<8x32xbf16>, vector<8x32xbf16>, vector<8x32xbf16>, vector<8x32xbf16>, vector<8x32xbf16>, vector<8x32xbf16>, vector<8x32xbf16>, vector<8x32xbf16>, vector<8x32xbf16> -> vector<8x512xbf16>
    %80 = tpu.concatenate %42, %43, %44, %45, %50, %51, %52, %53, %58, %59, %60, %61, %66, %67, %68, %69 in 1 : vector<8x32xbf16>, vector<8x32xbf16>, vector<8x32xbf16>, vector<8x32xbf16>, vector<8x32xbf16>, vector<8x32xbf16>, vector<8x32xbf16>, vector<8x32xbf16>, vector<8x32xbf16>, vector<8x32xbf16>, vector<8x32xbf16>, vector<8x32xbf16>, vector<8x32xbf16>, vector<8x32xbf16>, vector<8x32xbf16>, vector<8x32xbf16> -> vector<8x512xbf16>
    %81 = tpu.concatenate %44, %45, %46, %47, %52, %53, %54, %55, %60, %61, %62, %63, %68, %69, %70, %71 in 1 : vector<8x32xbf16>, vector<8x32xbf16>, vector<8x32xbf16>, vector<8x32xbf16>, vector<8x32xbf16>, vector<8x32xbf16>, vector<8x32xbf16>, vector<8x32xbf16>, vector<8x32xbf16>, vector<8x32xbf16>, vector<8x32xbf16>, vector<8x32xbf16>, vector<8x32xbf16>, vector<8x32xbf16>, vector<8x32xbf16>, vector<8x32xbf16> -> vector<8x512xbf16>
    %82 = tpu.concatenate %46, %47, %48, %49, %54, %55, %56, %57, %62, %63, %64, %65, %70, %71, %72, %73 in 1 : vector<8x32xbf16>, vector<8x32xbf16>, vector<8x32xbf16>, vector<8x32xbf16>, vector<8x32xbf16>, vector<8x32xbf16>, vector<8x32xbf16>, vector<8x32xbf16>, vector<8x32xbf16>, vector<8x32xbf16>, vector<8x32xbf16>, vector<8x32xbf16>, vector<8x32xbf16>, vector<8x32xbf16>, vector<8x32xbf16>, vector<8x32xbf16> -> vector<8x512xbf16>
    %83 = tpu.concatenate %74, %75, %76, %77, %78, %79, %80, %81, %82 in 0 : vector<8x512xbf16>, vector<8x512xbf16>, vector<8x512xbf16>, vector<8x512xbf16>, vector<8x512xbf16>, vector<8x512xbf16>, vector<8x512xbf16>, vector<8x512xbf16>, vector<8x512xbf16> -> vector<72x512xbf16>
    %c0_6 = arith.constant 0 : index
    %c0_7 = arith.constant 0 : index
    %84 = vector.load %arg3[%c0_6, %c0_7] : memref<512x64xbf16, #tpu.memory_space<vmem>>, vector<512x64xbf16>
    %cst_8 = arith.constant dense<0.000000e+00> : vector<72x64xf32>
    %85 = tpu.matmul %83, %84, %cst_8 {dimension_numbers = #tpu.dot_dimension_numbers<[1], [0], [0], [1], [0, 0, 1, 1], [], []>} : vector<72x512xbf16>, vector<512x64xbf16>, vector<72x64xf32> -> vector<72x64xf32>
    %c0_9 = arith.constant 0 : index
    %c0_10 = arith.constant 0 : index
    %86 = vector.load %arg4[%c0_9, %c0_10] : memref<1x64xf32, #tpu.memory_space<vmem>>, vector<1x64xf32>
    %87 = vector.broadcast %86 : vector<1x64xf32> to vector<72x64xf32>
    %88 = arith.addf %85, %87 : vector<72x64xf32>
    %cst_11 = arith.constant 0.000000e+00 : f32
    %89 = vector.broadcast %cst_11 : f32 to vector<72x64xf32>
    %90 = arith.maximumf %88, %89 : vector<72x64xf32>
    %91 = arith.truncf %90 : vector<72x64xf32> to vector<72x64xbf16>
    %92 = vector.extract_strided_slice %91 {offsets = [0, 0], sizes = [8, 64], strides = [1, 1]} : vector<72x64xbf16> to vector<8x64xbf16>
    %93 = vector.extract_strided_slice %91 {offsets = [8, 0], sizes = [8, 64], strides = [1, 1]} : vector<72x64xbf16> to vector<8x64xbf16>
    %94 = vector.extract_strided_slice %91 {offsets = [16, 0], sizes = [8, 64], strides = [1, 1]} : vector<72x64xbf16> to vector<8x64xbf16>
    %95 = vector.extract_strided_slice %91 {offsets = [24, 0], sizes = [8, 64], strides = [1, 1]} : vector<72x64xbf16> to vector<8x64xbf16>
    %96 = vector.extract_strided_slice %91 {offsets = [32, 0], sizes = [8, 64], strides = [1, 1]} : vector<72x64xbf16> to vector<8x64xbf16>
    %97 = vector.extract_strided_slice %91 {offsets = [40, 0], sizes = [8, 64], strides = [1, 1]} : vector<72x64xbf16> to vector<8x64xbf16>
    %98 = vector.extract_strided_slice %91 {offsets = [48, 0], sizes = [8, 64], strides = [1, 1]} : vector<72x64xbf16> to vector<8x64xbf16>
    %99 = vector.extract_strided_slice %91 {offsets = [56, 0], sizes = [8, 64], strides = [1, 1]} : vector<72x64xbf16> to vector<8x64xbf16>
    %100 = vector.extract_strided_slice %91 {offsets = [64, 0], sizes = [8, 64], strides = [1, 1]} : vector<72x64xbf16> to vector<8x64xbf16>
    %101 = tpu.concatenate %92, %93, %94, %95, %96, %97, %98, %99, %100 in 1 : vector<8x64xbf16>, vector<8x64xbf16>, vector<8x64xbf16>, vector<8x64xbf16>, vector<8x64xbf16>, vector<8x64xbf16>, vector<8x64xbf16>, vector<8x64xbf16>, vector<8x64xbf16> -> vector<8x576xbf16>
    %c0_12 = arith.constant 0 : index
    %c0_13 = arith.constant 0 : index
    %102 = vector.load %arg5[%c0_12, %c0_13] : memref<576x64xbf16, #tpu.memory_space<vmem>>, vector<576x64xbf16>
    %cst_14 = arith.constant dense<0.000000e+00> : vector<8x64xf32>
    %103 = tpu.matmul %101, %102, %cst_14 {dimension_numbers = #tpu.dot_dimension_numbers<[1], [0], [0], [1], [0, 0, 1, 1], [], []>} : vector<8x576xbf16>, vector<576x64xbf16>, vector<8x64xf32> -> vector<8x64xf32>
    %c0_15 = arith.constant 0 : index
    %c0_16 = arith.constant 0 : index
    %104 = vector.load %arg6[%c0_15, %c0_16] : memref<1x64xf32, #tpu.memory_space<vmem>>, vector<1x64xf32>
    %105 = vector.broadcast %104 : vector<1x64xf32> to vector<8x64xf32>
    %106 = arith.addf %103, %105 : vector<8x64xf32>
    %cst_17 = arith.constant 0.000000e+00 : f32
    %107 = vector.broadcast %cst_17 : f32 to vector<8x64xf32>
    %108 = arith.maximumf %106, %107 : vector<8x64xf32>
    %109 = arith.truncf %108 : vector<8x64xf32> to vector<8x64xbf16>
    %c0_18 = arith.constant 0 : index
    %c0_19 = arith.constant 0 : index
    %110 = vector.load %arg7[%c0_18, %c0_19] : memref<64x512xbf16, #tpu.memory_space<vmem>>, vector<64x512xbf16>
    %cst_20 = arith.constant dense<0.000000e+00> : vector<8x512xf32>
    %111 = tpu.matmul %109, %110, %cst_20 {dimension_numbers = #tpu.dot_dimension_numbers<[1], [0], [0], [1], [0, 0, 1, 1], [], []>} : vector<8x64xbf16>, vector<64x512xbf16>, vector<8x512xf32> -> vector<8x512xf32>
    %c0_21 = arith.constant 0 : index
    %c0_22 = arith.constant 0 : index
    %112 = vector.load %arg8[%c0_21, %c0_22] : memref<1x512xf32, #tpu.memory_space<vmem>>, vector<1x512xf32>
    %113 = vector.broadcast %112 : vector<1x512xf32> to vector<8x512xf32>
    %114 = arith.addf %111, %113 : vector<8x512xf32>
    %cst_23 = arith.constant 0.000000e+00 : f32
    %115 = vector.broadcast %cst_23 : f32 to vector<8x512xf32>
    %116 = arith.maximumf %114, %115 : vector<8x512xf32>
    %117 = arith.truncf %116 : vector<8x512xf32> to vector<8x512xbf16>
    %c0_24 = arith.constant 0 : index
    %c0_25 = arith.constant 0 : index
    %118 = vector.load %arg9[%c0_24, %c0_25] : memref<512x128xbf16, #tpu.memory_space<vmem>>, vector<512x128xbf16>
    %cst_26 = arith.constant dense<0.000000e+00> : vector<8x128xf32>
    %119 = tpu.matmul %117, %118, %cst_26 {dimension_numbers = #tpu.dot_dimension_numbers<[1], [0], [0], [1], [0, 0, 1, 1], [], []>} : vector<8x512xbf16>, vector<512x128xbf16>, vector<8x128xf32> -> vector<8x128xf32>
    %c0_27 = arith.constant 0 : index
    %c0_28 = arith.constant 0 : index
    %120 = vector.load %arg10[%c0_27, %c0_28] : memref<1x128xf32, #tpu.memory_space<vmem>>, vector<1x128xf32>
    %121 = vector.broadcast %120 : vector<1x128xf32> to vector<8x128xf32>
    %122 = arith.addf %119, %121 : vector<8x128xf32>
    %123 = tpu.iota {dimensions = array<i32: 1>} : vector<8x128xi32>
    %c4_i32 = arith.constant 4 : i32
    %124 = vector.broadcast %c4_i32 : i32 to vector<8x128xi32>
    %125 = arith.cmpi sge, %123, %124 : vector<8x128xi32>
    %c8_i32 = arith.constant 8 : i32
    %126 = vector.broadcast %c8_i32 : i32 to vector<8x128xi32>
    %127 = arith.cmpi slt, %123, %126 : vector<8x128xi32>
    %128 = arith.andi %125, %127 : vector<8x128xi1>
    %cst_29 = arith.constant -2.000000e+01 : f32
    %cst_30 = arith.constant 2.000000e+00 : f32
    %129 = vector.broadcast %cst_29 : f32 to vector<8x128xf32>
    %130 = arith.maximumf %129, %122 : vector<8x128xf32>
    %131 = vector.broadcast %cst_30 : f32 to vector<8x128xf32>
    %132 = arith.minimumf %131, %130 : vector<8x128xf32>
    %133 = math.exp %132 : vector<8x128xf32>
    %134 = arith.select %128, %133, %122 : vector<8x128xi1>, vector<8x128xf32>
    %c0_31 = arith.constant 0 : index
    %c0_32 = arith.constant 0 : index
    %135 = vector.load %arg11[%c0_31, %c0_32] : memref<8x128xf32, #tpu.memory_space<vmem>>, vector<8x128xf32>
    tpu.vector_store %arg11[%c0_31, %c0_32], %134 {strides = array<i32>} : memref<8x128xf32, #tpu.memory_space<vmem>>, vector<8x128xf32>,
    return
  }
}

</mosaic_0001>

<llo_original>
// kernel: policy_network_forward.1
$region0: #{policy_network_forward.1}
  #allocation0 [shape = 'u32[]', space=smem, size = 0x4, offset = 0x4, fixed_abs, tag = 'smem constant byte address 0x4 - core index']
  #allocation1 [shape = 'u32[72,128]{1,0:T(1,128)}', space=vmem, size = 0x9000, scoped, tag = 'internal scratch']
  %s0 = inlined_call_operand.vmem [shape: f32[512,192], index: 0, kind: input, shape index: {}]
  %s1 = inlined_call_operand.vmem [shape: bf16[192,32], index: 1, kind: input, shape index: {}]
  %s2 = inlined_call_operand.vmem [shape: f32[1,32], index: 2, kind: input, shape index: {}]
  %s3 = inlined_call_operand.vmem [shape: bf16[512,64], index: 3, kind: input, shape index: {}]
  %s4 = inlined_call_operand.vmem [shape: f32[1,64], index: 4, kind: input, shape index: {}]
  %s5 = inlined_call_operand.vmem [shape: bf16[576,64], index: 5, kind: input, shape index: {}]
  %s6 = inlined_call_operand.vmem [shape: f32[1,64], index: 6, kind: input, shape index: {}]
  %s7 = inlined_call_operand.vmem [shape: bf16[64,512], index: 7, kind: input, shape index: {}]
  %s8 = inlined_call_operand.vmem [shape: f32[1,512], index: 8, kind: input, shape index: {}]
  %s9 = inlined_call_operand.vmem [shape: bf16[512,128], index: 9, kind: input, shape index: {}]
  %s10 = inlined_call_operand.vmem [shape: f32[1,128], index: 10, kind: input, shape index: {}]
  %s11 = inlined_call_operand.vmem [shape: f32[8,128], index: 11, kind: output, shape index: {}]
  %s12 = sld [smem:[#allocation0]]
  $region54: #{policy_network_forward.1} parent=0
    _
  %s14 = ssub.s32 1, %s12
  %s15 = scalar_select 0, %s14, %s12
  // Predicated region
  $region2: #{policy_network_forward.1} parent=0 // pred_check
    _
  $region3: #{policy_network_forward.1} parent=0 // pred_check_branch
    %17 = sbr.rel (0) target = $region5
  $region4: #{policy_network_forward.1} parent=0 // pred_region
    _
  $region5: #{policy_network_forward.1} parent=0 // pred_fallthru
    _
  // Predicated region
  $region6: #{policy_network_forward.1} parent=0 // pred_check
    _
  $region7: #{policy_network_forward.1} parent=0 // pred_check_branch
    %19 = sbr.rel (0) target = $region9
  $region8: #{policy_network_forward.1} parent=0 // pred_region
    _
  $region9: #{policy_network_forward.1} parent=0 // pred_fallthru
    _
  // Predicated region
  $region10: #{policy_network_forward.1} parent=0 // pred_check
    _
  $region11: #{policy_network_forward.1} parent=0 // pred_check_branch
    %21 = sbr.rel (0) target = $region13
  $region12: #{policy_network_forward.1} parent=0 // pred_region
    _
  $region13: #{policy_network_forward.1} parent=0 // pred_fallthru
    _
  // Predicated region
  $region14: #{policy_network_forward.1} parent=0 // pred_check
    _
  $region15: #{policy_network_forward.1} parent=0 // pred_check_branch
    %23 = sbr.rel (0) target = $region17
  $region16: #{policy_network_forward.1} parent=0 // pred_region
    _
  $region17: #{policy_network_forward.1} parent=0 // pred_fallthru
    _
  // Predicated region
  $region18: #{policy_network_forward.1} parent=0 // pred_check
    _
  $region19: #{policy_network_forward.1} parent=0 // pred_check_branch
    %25 = sbr.rel (0) target = $region21
  $region20: #{policy_network_forward.1} parent=0 // pred_region
    _
  $region21: #{policy_network_forward.1} parent=0 // pred_fallthru
    _
  // Predicated region
  $region22: #{policy_network_forward.1} parent=0 // pred_check
    _
  $region23: #{policy_network_forward.1} parent=0 // pred_check_branch
    %27 = sbr.rel (0) target = $region25
  $region24: #{policy_network_forward.1} parent=0 // pred_region
    _
  $region25: #{policy_network_forward.1} parent=0 // pred_fallthru
    _
  // Predicated region
  $region26: #{policy_network_forward.1} parent=0 // pred_check
    _
  $region27: #{policy_network_forward.1} parent=0 // pred_check_branch
    %29 = sbr.rel (0) target = $region29
  $region28: #{policy_network_forward.1} parent=0 // pred_region
    _
  $region29: #{policy_network_forward.1} parent=0 // pred_fallthru
    _
  // Predicated region
  $region30: #{policy_network_forward.1} parent=0 // pred_check
    _
  $region31: #{policy_network_forward.1} parent=0 // pred_check_branch
    %31 = sbr.rel (0) target = $region33
  $region32: #{policy_network_forward.1} parent=0 // pred_region
    _
  $region33: #{policy_network_forward.1} parent=0 // pred_fallthru
    _
  // Predicated region
  $region34: #{policy_network_forward.1} parent=0 // pred_check
    _
  $region35: #{policy_network_forward.1} parent=0 // pred_check_branch
    %33 = sbr.rel (0) target = $region37
  $region36: #{policy_network_forward.1} parent=0 // pred_region
    _
  $region37: #{policy_network_forward.1} parent=0 // pred_fallthru
    _
  // Predicated region
  $region38: #{policy_network_forward.1} parent=0 // pred_check
    _
  $region39: #{policy_network_forward.1} parent=0 // pred_check_branch
    %35 = sbr.rel (0) target = $region41
  $region40: #{policy_network_forward.1} parent=0 // pred_region
    _
  $region41: #{policy_network_forward.1} parent=0 // pred_fallthru
    _
  // Predicated region
  $region42: #{policy_network_forward.1} parent=0 // pred_check
    _
  $region43: #{policy_network_forward.1} parent=0 // pred_check_branch
    %37 = sbr.rel (0) target = $region45
  $region44: #{policy_network_forward.1} parent=0 // pred_region
    _
  $region45: #{policy_network_forward.1} parent=0 // pred_fallthru
    _
  %v39 = vld [vmem:[%s0] sm:$0xff]
  %v40 = vld [vmem:[%s0 + $0x8] sm:$0xff]
  %v41 = vld [vmem:[%s0 + $0x10] sm:$0xff]
  %v42 = vld [vmem:[%s0 + $0x18] sm:$0xff]
  %v43 = vld [vmem:[%s0 + $0x20] sm:$0xff]
  %v44 = vld [vmem:[%s0 + $0x28] sm:$0xff]
  %v45 = vld [vmem:[%s0 + $0x30] sm:$0xff]
  %v46 = vld [vmem:[%s0 + $0x38] sm:$0xff]
  %v47 = vld [vmem:[%s0 + $0x40] sm:$0xff]
  %v48 = vld [vmem:[%s0 + $0x48] sm:$0xff]
  %v49 = vld [vmem:[%s0 + $0x50] sm:$0xff]
  %v50 = vld [vmem:[%s0 + $0x58] sm:$0xff]
  %v51 = vld [vmem:[%s0 + $0x60] sm:$0xff]
  %v52 = vld [vmem:[%s0 + $0x68] sm:$0xff]
  %v53 = vld [vmem:[%s0 + $0x70] sm:$0xff]
  %v54 = vld [vmem:[%s0 + $0x78] sm:$0xff]
  %v55 = vld [vmem:[%s0 + $0x80] sm:$0xff]
  %v56 = vld [vmem:[%s0 + $0x88] sm:$0xff]
  %v57 = vld [vmem:[%s0 + $0x90] sm:$0xff]
  %v58 = vld [vmem:[%s0 + $0x98] sm:$0xff]
  %v59 = vld [vmem:[%s0 + $0xa0] sm:$0xff]
  %v60 = vld [vmem:[%s0 + $0xa8] sm:$0xff]
  %v61 = vld [vmem:[%s0 + $0xb0] sm:$0xff]
  %v62 = vld [vmem:[%s0 + $0xb8] sm:$0xff]
  %v63 = vld [vmem:[%s0 + $0xc0] sm:$0xff]
  %v64 = vld [vmem:[%s0 + $0xc8] sm:$0xff]
  %v65 = vld [vmem:[%s0 + $0xd0] sm:$0xff]
  %v66 = vld [vmem:[%s0 + $0xd8] sm:$0xff]
  %v67 = vld [vmem:[%s0 + $0xe0] sm:$0xff]
  %v68 = vld [vmem:[%s0 + $0xe8] sm:$0xff]
  %v69 = vld [vmem:[%s0 + $0xf0] sm:$0xff]
  %v70 = vld [vmem:[%s0 + $0xf8] sm:$0xff]
  %v71 = vld [vmem:[%s0 + $0x100] sm:$0xff]
  %v72 = vld [vmem:[%s0 + $0x108] sm:$0xff]
  %v73 = vld [vmem:[%s0 + $0x110] sm:$0xff]
  %v74 = vld [vmem:[%s0 + $0x118] sm:$0xff]
  %v75 = vld [vmem:[%s0 + $0x120] sm:$0xff]
  %v76 = vld [vmem:[%s0 + $0x128] sm:$0xff]
  %v77 = vld [vmem:[%s0 + $0x130] sm:$0xff]
  %v78 = vld [vmem:[%s0 + $0x138] sm:$0xff]
  %v79 = vld [vmem:[%s0 + $0x140] sm:$0xff]
  %v80 = vld [vmem:[%s0 + $0x148] sm:$0xff]
  %v81 = vld [vmem:[%s0 + $0x150] sm:$0xff]
  %v82 = vld [vmem:[%s0 + $0x158] sm:$0xff]
  %v83 = vld [vmem:[%s0 + $0x160] sm:$0xff]
  %v84 = vld [vmem:[%s0 + $0x168] sm:$0xff]
  %v85 = vld [vmem:[%s0 + $0x170] sm:$0xff]
  %v86 = vld [vmem:[%s0 + $0x178] sm:$0xff]
  %v87 = vld [vmem:[%s0 + $0x180] sm:$0xff]
  %v88 = vld [vmem:[%s0 + $0x188] sm:$0xff]
  %v89 = vld [vmem:[%s0 + $0x190] sm:$0xff]
  %v90 = vld [vmem:[%s0 + $0x198] sm:$0xff]
  %v91 = vld [vmem:[%s0 + $0x1a0] sm:$0xff]
  %v92 = vld [vmem:[%s0 + $0x1a8] sm:$0xff]
  %v93 = vld [vmem:[%s0 + $0x1b0] sm:$0xff]
  %v94 = vld [vmem:[%s0 + $0x1b8] sm:$0xff]
  %v95 = vld [vmem:[%s0 + $0x1c0] sm:$0xff]
  %v96 = vld [vmem:[%s0 + $0x1c8] sm:$0xff]
  %v97 = vld [vmem:[%s0 + $0x1d0] sm:$0xff]
  %v98 = vld [vmem:[%s0 + $0x1d8] sm:$0xff]
  %v99 = vld [vmem:[%s0 + $0x1e0] sm:$0xff]
  %v100 = vld [vmem:[%s0 + $0x1e8] sm:$0xff]
  %v101 = vld [vmem:[%s0 + $0x1f0] sm:$0xff]
  %v102 = vld [vmem:[%s0 + $0x1f8] sm:$0xff]
  %v103 = vld [vmem:[%s0 + $0x200] sm:$0xff]
  %v104 = vld [vmem:[%s0 + $0x208] sm:$0xff]
  %v105 = vld [vmem:[%s0 + $0x210] sm:$0xff]
  %v106 = vld [vmem:[%s0 + $0x218] sm:$0xff]
  %v107 = vld [vmem:[%s0 + $0x220] sm:$0xff]
  %v108 = vld [vmem:[%s0 + $0x228] sm:$0xff]
  %v109 = vld [vmem:[%s0 + $0x230] sm:$0xff]
  %v110 = vld [vmem:[%s0 + $0x238] sm:$0xff]
  %v111 = vld [vmem:[%s0 + $0x240] sm:$0xff]
  %v112 = vld [vmem:[%s0 + $0x248] sm:$0xff]
  %v113 = vld [vmem:[%s0 + $0x250] sm:$0xff]
  %v114 = vld [vmem:[%s0 + $0x258] sm:$0xff]
  %v115 = vld [vmem:[%s0 + $0x260] sm:$0xff]
  %v116 = vld [vmem:[%s0 + $0x268] sm:$0xff]
  %v117 = vld [vmem:[%s0 + $0x270] sm:$0xff]
  %v118 = vld [vmem:[%s0 + $0x278] sm:$0xff]
  %v119 = vld [vmem:[%s0 + $0x280] sm:$0xff]
  %v120 = vld [vmem:[%s0 + $0x288] sm:$0xff]
  %v121 = vld [vmem:[%s0 + $0x290] sm:$0xff]
  %v122 = vld [vmem:[%s0 + $0x298] sm:$0xff]
  %v123 = vld [vmem:[%s0 + $0x2a0] sm:$0xff]
  %v124 = vld [vmem:[%s0 + $0x2a8] sm:$0xff]
  %v125 = vld [vmem:[%s0 + $0x2b0] sm:$0xff]
  %v126 = vld [vmem:[%s0 + $0x2b8] sm:$0xff]
  %v127 = vld [vmem:[%s0 + $0x2c0] sm:$0xff]
  %v128 = vld [vmem:[%s0 + $0x2c8] sm:$0xff]
  %v129 = vld [vmem:[%s0 + $0x2d0] sm:$0xff]
  %v130 = vld [vmem:[%s0 + $0x2d8] sm:$0xff]
  %v131 = vld [vmem:[%s0 + $0x2e0] sm:$0xff]
  %v132 = vld [vmem:[%s0 + $0x2e8] sm:$0xff]
  %v133 = vld [vmem:[%s0 + $0x2f0] sm:$0xff]
  %v134 = vld [vmem:[%s0 + $0x2f8] sm:$0xff]
  %v135 = vld [vmem:[%s0 + $0x300] sm:$0xff]
  %v136 = vld [vmem:[%s0 + $0x308] sm:$0xff]
  %v137 = vld [vmem:[%s0 + $0x310] sm:$0xff]
  %v138 = vld [vmem:[%s0 + $0x318] sm:$0xff]
  %v139 = vld [vmem:[%s0 + $0x320] sm:$0xff]
  %v140 = vld [vmem:[%s0 + $0x328] sm:$0xff]
  %v141 = vld [vmem:[%s0 + $0x330] sm:$0xff]
  %v142 = vld [vmem:[%s0 + $0x338] sm:$0xff]
  %v143 = vld [vmem:[%s0 + $0x340] sm:$0xff]
  %v144 = vld [vmem:[%s0 + $0x348] sm:$0xff]
  %v145 = vld [vmem:[%s0 + $0x350] sm:$0xff]
  %v146 = vld [vmem:[%s0 + $0x358] sm:$0xff]
  %v147 = vld [vmem:[%s0 + $0x360] sm:$0xff]
  %v148 = vld [vmem:[%s0 + $0x368] sm:$0xff]
  %v149 = vld [vmem:[%s0 + $0x370] sm:$0xff]
  %v150 = vld [vmem:[%s0 + $0x378] sm:$0xff]
  %v151 = vld [vmem:[%s0 + $0x380] sm:$0xff]
  %v152 = vld [vmem:[%s0 + $0x388] sm:$0xff]
  %v153 = vld [vmem:[%s0 + $0x390] sm:$0xff]
  %v154 = vld [vmem:[%s0 + $0x398] sm:$0xff]
  %v155 = vld [vmem:[%s0 + $0x3a0] sm:$0xff]
  %v156 = vld [vmem:[%s0 + $0x3a8] sm:$0xff]
  %v157 = vld [vmem:[%s0 + $0x3b0] sm:$0xff]
  %v158 = vld [vmem:[%s0 + $0x3b8] sm:$0xff]
  %v159 = vld [vmem:[%s0 + $0x3c0] sm:$0xff]
  %v160 = vld [vmem:[%s0 + $0x3c8] sm:$0xff]
  %v161 = vld [vmem:[%s0 + $0x3d0] sm:$0xff]
  %v162 = vld [vmem:[%s0 + $0x3d8] sm:$0xff]
  %v163 = vld [vmem:[%s0 + $0x3e0] sm:$0xff]
  %v164 = vld [vmem:[%s0 + $0x3e8] sm:$0xff]
  %v165 = vld [vmem:[%s0 + $0x3f0] sm:$0xff]
  %v166 = vld [vmem:[%s0 + $0x3f8] sm:$0xff]
  %v167 = vpack.c.bf16 %v41, %v39
  %v168 = vpack.c.bf16 %v42, %v40
  %v169 = vpack.c.bf16 %v45, %v43
  %v170 = vpack.c.bf16 %v46, %v44
  %v171 = vpack.c.bf16 %v49, %v47
  %v172 = vpack.c.bf16 %v50, %v48
  %v173 = vpack.c.bf16 %v53, %v51
  %v174 = vpack.c.bf16 %v54, %v52
  %v175 = vpack.c.bf16 %v57, %v55
  %v176 = vpack.c.bf16 %v58, %v56
  %v177 = vpack.c.bf16 %v61, %v59
  %v178 = vpack.c.bf16 %v62, %v60
  %v179 = vpack.c.bf16 %v65, %v63
  %v180 = vpack.c.bf16 %v66, %v64
  %v181 = vpack.c.bf16 %v69, %v67
  %v182 = vpack.c.bf16 %v70, %v68
  %v183 = vpack.c.bf16 %v73, %v71
  %v184 = vpack.c.bf16 %v74, %v72
  %v185 = vpack.c.bf16 %v77, %v75
  %v186 = vpack.c.bf16 %v78, %v76
  %v187 = vpack.c.bf16 %v81, %v79
  %v188 = vpack.c.bf16 %v82, %v80
  %v189 = vpack.c.bf16 %v85, %v83
  %v190 = vpack.c.bf16 %v86, %v84
  %v191 = vpack.c.bf16 %v89, %v87
  %v192 = vpack.c.bf16 %v90, %v88
  %v193 = vpack.c.bf16 %v93, %v91
  %v194 = vpack.c.bf16 %v94, %v92
  %v195 = vpack.c.bf16 %v97, %v95
  %v196 = vpack.c.bf16 %v98, %v96
  %v197 = vpack.c.bf16 %v101, %v99
  %v198 = vpack.c.bf16 %v102, %v100
  %v199 = vpack.c.bf16 %v105, %v103
  %v200 = vpack.c.bf16 %v106, %v104
  %v201 = vpack.c.bf16 %v109, %v107
  %v202 = vpack.c.bf16 %v110, %v108
  %v203 = vpack.c.bf16 %v113, %v111
  %v204 = vpack.c.bf16 %v114, %v112
  %v205 = vpack.c.bf16 %v117, %v115
  %v206 = vpack.c.bf16 %v118, %v116
  %v207 = vpack.c.bf16 %v121, %v119
  %v208 = vpack.c.bf16 %v122, %v120
  %v209 = vpack.c.bf16 %v125, %v123
  %v210 = vpack.c.bf16 %v126, %v124
  %v211 = vpack.c.bf16 %v129, %v127
  %v212 = vpack.c.bf16 %v130, %v128
  %v213 = vpack.c.bf16 %v133, %v131
  %v214 = vpack.c.bf16 %v134, %v132
  %v215 = vpack.c.bf16 %v137, %v135
  %v216 = vpack.c.bf16 %v138, %v136
  %v217 = vpack.c.bf16 %v141, %v139
  %v218 = vpack.c.bf16 %v142, %v140
  %v219 = vpack.c.bf16 %v145, %v143
  %v220 = vpack.c.bf16 %v146, %v144
  %v221 = vpack.c.bf16 %v149, %v147
  %v222 = vpack.c.bf16 %v150, %v148
  %v223 = vpack.c.bf16 %v153, %v151
  %v224 = vpack.c.bf16 %v154, %v152
  %v225 = vpack.c.bf16 %v157, %v155
  %v226 = vpack.c.bf16 %v158, %v156
  %v227 = vpack.c.bf16 %v161, %v159
  %v228 = vpack.c.bf16 %v162, %v160
  %v229 = vpack.c.bf16 %v165, %v163
  %v230 = vpack.c.bf16 %v166, %v164
  %v231 = vld [vmem:[%s1] sm:$0xf]
  %v232 = vld [vmem:[%s1 + $0x4] sm:$0xf]
  %v233 = vld [vmem:[%s1 + $0x8] sm:$0xf]
  %v234 = vld [vmem:[%s1 + $0xc] sm:$0xf]
  %v235 = vld [vmem:[%s1 + $0x10] sm:$0xf]
  %v236 = vld [vmem:[%s1 + $0x14] sm:$0xf]
  %v237 = vld [vmem:[%s1 + $0x18] sm:$0xf]
  %v238 = vld [vmem:[%s1 + $0x1c] sm:$0xf]
  %v239 = vld [vmem:[%s1 + $0x20] sm:$0xf]
  %v240 = vld [vmem:[%s1 + $0x24] sm:$0xf]
  %v241 = vld [vmem:[%s1 + $0x28] sm:$0xf]
  %v242 = vld [vmem:[%s1 + $0x2c] sm:$0xf]
  %v243 = vld [vmem:[%s1 + $0x30] sm:$0xf]
  %v244 = vld [vmem:[%s1 + $0x34] sm:$0xf]
  %v245 = vld [vmem:[%s1 + $0x38] sm:$0xf]
  %v246 = vld [vmem:[%s1 + $0x3c] sm:$0xf]
  %v247 = vld [vmem:[%s1 + $0x40] sm:$0xf]
  %v248 = vld [vmem:[%s1 + $0x44] sm:$0xf]
  %v249 = vld [vmem:[%s1 + $0x48] sm:$0xf]
  %v250 = vld [vmem:[%s1 + $0x4c] sm:$0xf]
  %v251 = vld [vmem:[%s1 + $0x50] sm:$0xf]
  %v252 = vld [vmem:[%s1 + $0x54] sm:$0xf]
  %v253 = vld [vmem:[%s1 + $0x58] sm:$0xf]
  %v254 = vld [vmem:[%s1 + $0x5c] sm:$0xf]
  %v255 = vld [vmem:[%s2] sm:$0x1]
  %v257 = vperm.slane %v255, 0
  %v283 = vunpack.c.l.b16 %v231
  %v284 = vunpack.c.l.b16 %v232
  %v285 = vunpack.c.l.b16 %v233
  %v286 = vunpack.c.l.b16 %v234
  %v287 = vunpack.c.l.b16 %v235
  %v288 = vunpack.c.l.b16 %v236
  %v289 = vunpack.c.l.b16 %v237
  %v290 = vunpack.c.l.b16 %v238
  %v291 = vunpack.c.l.b16 %v239
  %v292 = vunpack.c.l.b16 %v240
  %v293 = vunpack.c.l.b16 %v241
  %v294 = vunpack.c.l.b16 %v242
  %v295 = vunpack.c.l.b16 %v243
  %v296 = vunpack.c.l.b16 %v244
  %v297 = vunpack.c.l.b16 %v245
  %v298 = vunpack.c.l.b16 %v246
  %v299 = vunpack.c.l.b16 %v247
  %v300 = vunpack.c.l.b16 %v248
  %v301 = vunpack.c.l.b16 %v249
  %v302 = vunpack.c.l.b16 %v250
  %v303 = vunpack.c.l.b16 %v251
  %v304 = vunpack.c.l.b16 %v252
  %v305 = vunpack.c.l.b16 %v253
  %v306 = vunpack.c.l.b16 %v254
  %v307 = vpack.c.b16 %v284, %v283
  %v308 = vpack.c.b16 %v286, %v285
  %v309 = vpack.c.b16 %v288, %v287
  %v310 = vpack.c.b16 %v290, %v289
  %v311 = vpack.c.b16 %v292, %v291
  %v312 = vpack.c.b16 %v294, %v293
  %v313 = vpack.c.b16 %v296, %v295
  %v314 = vpack.c.b16 %v298, %v297
  %v315 = vpack.c.b16 %v300, %v299
  %v316 = vpack.c.b16 %v302, %v301
  %v317 = vpack.c.b16 %v304, %v303
  %v318 = vpack.c.b16 %v306, %v305
  %vm331 = vcmask 523264
  %v333 = vsel %vm331, %v168, 0
  %v336 = vsel %vm331, %v170, 0
  %v339 = vsel %vm331, %v172, 0
  %v342 = vsel %vm331, %v174, 0
  %v345 = vsel %vm331, %v176, 0
  %v348 = vsel %vm331, %v178, 0
  %v351 = vsel %vm331, %v180, 0
  %v354 = vsel %vm331, %v182, 0
  %v357 = vsel %vm331, %v184, 0
  %v360 = vsel %vm331, %v186, 0
  %v363 = vsel %vm331, %v188, 0
  %v366 = vsel %vm331, %v190, 0
  %v369 = vsel %vm331, %v192, 0
  %v372 = vsel %vm331, %v194, 0
  %v375 = vsel %vm331, %v196, 0
  %v378 = vsel %vm331, %v198, 0
  %v381 = vsel %vm331, %v200, 0
  %v384 = vsel %vm331, %v202, 0
  %v387 = vsel %vm331, %v204, 0
  %v390 = vsel %vm331, %v206, 0
  %v393 = vsel %vm331, %v208, 0
  %v396 = vsel %vm331, %v210, 0
  %v399 = vsel %vm331, %v212, 0
  %v402 = vsel %vm331, %v214, 0
  %v405 = vsel %vm331, %v216, 0
  %v408 = vsel %vm331, %v218, 0
  %v411 = vsel %vm331, %v220, 0
  %v414 = vsel %vm331, %v222, 0
  %v417 = vsel %vm331, %v224, 0
  %v420 = vsel %vm331, %v226, 0
  %v423 = vsel %vm331, %v228, 0
  %v426 = vsel %vm331, %v230, 0
  %428 = vmatpush.bf16.msra.mxu0 %v314
  %429 = vmatpush.bf16.msra.mxu0 %v313
  %430 = vmatpush.bf16.msra.mxu0 %v312
  %431 = vmatpush.bf16.msra.mxu0 %v311
  %432 = vmatpush.bf16.msra.mxu0 %v310
  %433 = vmatpush.bf16.msra.mxu0 %v309
  %434 = vmatpush.bf16.msra.mxu0 %v308
  %435 = vmatpush.bf16.msra.mxu0 %v307
  %436 = vmatmul.bf16.gmra.mxu0 %v167
  %v437 = vpop.f32.mrf.mxu0
  %v438 = vadd.f32 %v257, %v437
  %v439 = vpop.f32.mrf.mxu0
  %v440 = vadd.f32 %v257, %v439
  %441 = vmatmul.bf16.gmra.mxu0 %v169
  %v442 = vpop.f32.mrf.mxu0
  %v443 = vadd.f32 %v257, %v442
  %v444 = vpop.f32.mrf.mxu0
  %v445 = vadd.f32 %v257, %v444
  %446 = vmatmul.bf16.gmra.mxu0 %v171
  %v447 = vpop.f32.mrf.mxu0
  %v448 = vadd.f32 %v257, %v447
  %v449 = vpop.f32.mrf.mxu0
  %v450 = vadd.f32 %v257, %v449
  %451 = vmatmul.bf16.gmra.mxu0 %v173
  %v452 = vpop.f32.mrf.mxu0
  %v453 = vadd.f32 %v257, %v452
  %v454 = vpop.f32.mrf.mxu0
  %v455 = vadd.f32 %v257, %v454
  %456 = vmatmul.bf16.gmra.mxu0 %v175
  %v457 = vpop.f32.mrf.mxu0
  %v458 = vadd.f32 %v257, %v457
  %v459 = vpop.f32.mrf.mxu0
  %v460 = vadd.f32 %v257, %v459
  %461 = vmatmul.bf16.gmra.mxu0 %v177
  %v462 = vpop.f32.mrf.mxu0
  %v463 = vadd.f32 %v257, %v462
  %v464 = vpop.f32.mrf.mxu0
  %v465 = vadd.f32 %v257, %v464
  %466 = vmatmul.bf16.gmra.mxu0 %v179
  %v467 = vpop.f32.mrf.mxu0
  %v468 = vadd.f32 %v257, %v467
  %v469 = vpop.f32.mrf.mxu0
  %v470 = vadd.f32 %v257, %v469
  %471 = vmatmul.bf16.gmra.mxu0 %v181
  %v472 = vpop.f32.mrf.mxu0
  %v473 = vadd.f32 %v257, %v472
  %v474 = vpop.f32.mrf.mxu0
  %v475 = vadd.f32 %v257, %v474
  %476 = vmatmul.bf16.gmra.mxu0 %v183
  %v477 = vpop.f32.mrf.mxu0
  %v478 = vadd.f32 %v257, %v477
  %v479 = vpop.f32.mrf.mxu0
  %v480 = vadd.f32 %v257, %v479
  %481 = vmatmul.bf16.gmra.mxu0 %v185
  %v482 = vpop.f32.mrf.mxu0
  %v483 = vadd.f32 %v257, %v482
  %v484 = vpop.f32.mrf.mxu0
  %v485 = vadd.f32 %v257, %v484
  %486 = vmatmul.bf16.gmra.mxu0 %v187
  %v487 = vpop.f32.mrf.mxu0
  %v488 = vadd.f32 %v257, %v487
  %v489 = vpop.f32.mrf.mxu0
  %v490 = vadd.f32 %v257, %v489
  %491 = vmatmul.bf16.gmra.mxu0 %v189
  %v492 = vpop.f32.mrf.mxu0
  %v493 = vadd.f32 %v257, %v492
  %v494 = vpop.f32.mrf.mxu0
  %v495 = vadd.f32 %v257, %v494
  %496 = vmatmul.bf16.gmra.mxu0 %v191
  %v497 = vpop.f32.mrf.mxu0
  %v498 = vadd.f32 %v257, %v497
  %v499 = vpop.f32.mrf.mxu0
  %v500 = vadd.f32 %v257, %v499
  %501 = vmatmul.bf16.gmra.mxu0 %v193
  %v502 = vpop.f32.mrf.mxu0
  %v503 = vadd.f32 %v257, %v502
  %v504 = vpop.f32.mrf.mxu0
  %v505 = vadd.f32 %v257, %v504
  %506 = vmatmul.bf16.gmra.mxu0 %v195
  %v507 = vpop.f32.mrf.mxu0
  %v508 = vadd.f32 %v257, %v507
  %v509 = vpop.f32.mrf.mxu0
  %v510 = vadd.f32 %v257, %v509
  %511 = vmatmul.bf16.gmra.mxu0 %v197
  %v512 = vpop.f32.mrf.mxu0
  %v513 = vadd.f32 %v257, %v512
  %v514 = vpop.f32.mrf.mxu0
  %v515 = vadd.f32 %v257, %v514
  %516 = vmatmul.bf16.gmra.mxu0 %v199
  %v517 = vpop.f32.mrf.mxu0
  %v518 = vadd.f32 %v257, %v517
  %v519 = vpop.f32.mrf.mxu0
  %v520 = vadd.f32 %v257, %v519
  %521 = vmatmul.bf16.gmra.mxu0 %v201
  %v522 = vpop.f32.mrf.mxu0
  %v523 = vadd.f32 %v257, %v522
  %v524 = vpop.f32.mrf.mxu0
  %v525 = vadd.f32 %v257, %v524
  %526 = vmatmul.bf16.gmra.mxu0 %v203
  %v527 = vpop.f32.mrf.mxu0
  %v528 = vadd.f32 %v257, %v527
  %v529 = vpop.f32.mrf.mxu0
  %v530 = vadd.f32 %v257, %v529
  %531 = vmatmul.bf16.gmra.mxu0 %v205
  %v532 = vpop.f32.mrf.mxu0
  %v533 = vadd.f32 %v257, %v532
  %v534 = vpop.f32.mrf.mxu0
  %v535 = vadd.f32 %v257, %v534
  %536 = vmatmul.bf16.gmra.mxu0 %v207
  %v537 = vpop.f32.mrf.mxu0
  %v538 = vadd.f32 %v257, %v537
  %v539 = vpop.f32.mrf.mxu0
  %v540 = vadd.f32 %v257, %v539
  %541 = vmatmul.bf16.gmra.mxu0 %v209
  %v542 = vpop.f32.mrf.mxu0
  %v543 = vadd.f32 %v257, %v542
  %v544 = vpop.f32.mrf.mxu0
  %v545 = vadd.f32 %v257, %v544
  %546 = vmatmul.bf16.gmra.mxu0 %v211
  %v547 = vpop.f32.mrf.mxu0
  %v548 = vadd.f32 %v257, %v547
  %v549 = vpop.f32.mrf.mxu0
  %v550 = vadd.f32 %v257, %v549
  %551 = vmatmul.bf16.gmra.mxu0 %v213
  %v552 = vpop.f32.mrf.mxu0
  %v553 = vadd.f32 %v257, %v552
  %v554 = vpop.f32.mrf.mxu0
  %v555 = vadd.f32 %v257, %v554
  %556 = vmatmul.bf16.gmra.mxu0 %v215
  %v557 = vpop.f32.mrf.mxu0
  %v558 = vadd.f32 %v257, %v557
  %v559 = vpop.f32.mrf.mxu0
  %v560 = vadd.f32 %v257, %v559
  %561 = vmatmul.bf16.gmra.mxu0 %v217
  %v562 = vpop.f32.mrf.mxu0
  %v563 = vadd.f32 %v257, %v562
  %v564 = vpop.f32.mrf.mxu0
  %v565 = vadd.f32 %v257, %v564
  %566 = vmatmul.bf16.gmra.mxu0 %v219
  %v567 = vpop.f32.mrf.mxu0
  %v568 = vadd.f32 %v257, %v567
  %v569 = vpop.f32.mrf.mxu0
  %v570 = vadd.f32 %v257, %v569
  %571 = vmatmul.bf16.gmra.mxu0 %v221
  %v572 = vpop.f32.mrf.mxu0
  %v573 = vadd.f32 %v257, %v572
  %v574 = vpop.f32.mrf.mxu0
  %v575 = vadd.f32 %v257, %v574
  %576 = vmatmul.bf16.gmra.mxu0 %v223
  %v577 = vpop.f32.mrf.mxu0
  %v578 = vadd.f32 %v257, %v577
  %v579 = vpop.f32.mrf.mxu0
  %v580 = vadd.f32 %v257, %v579
  %581 = vmatmul.bf16.gmra.mxu0 %v225
  %v582 = vpop.f32.mrf.mxu0
  %v583 = vadd.f32 %v257, %v582
  %v584 = vpop.f32.mrf.mxu0
  %v585 = vadd.f32 %v257, %v584
  %586 = vmatmul.bf16.gmra.mxu0 %v227
  %v587 = vpop.f32.mrf.mxu0
  %v588 = vadd.f32 %v257, %v587
  %v589 = vpop.f32.mrf.mxu0
  %v590 = vadd.f32 %v257, %v589
  %591 = vmatmul.bf16.gmra.mxu0 %v229
  %v592 = vpop.f32.mrf.mxu0
  %v593 = vadd.f32 %v257, %v592
  %v594 = vpop.f32.mrf.mxu0
  %v595 = vadd.f32 %v257, %v594
  %596 = vdwg.mxu0
  %597 = vmatpush.bf16.msra.mxu0 0
  %598 = vmatpush.bf16.msra.mxu0 0
  %599 = vmatpush.bf16.msra.mxu0 0
  %600 = vmatpush.bf16.msra.mxu0 0
  %601 = vmatpush.bf16.msra.mxu0 %v318
  %602 = vmatpush.bf16.msra.mxu0 %v317
  %603 = vmatpush.bf16.msra.mxu0 %v316
  %604 = vmatpush.bf16.msra.mxu0 %v315
  %605 = vmatmul.bf16.gmra.mxu0 %v333
  %v606 = vpop.f32.mrf.mxu0
  %v607 = vadd.f32 %v438, %v606
  %v608 = vpop.f32.mrf.mxu0
  %v609 = vadd.f32 %v440, %v608
  %610 = vmatmul.bf16.gmra.mxu0 %v336
  %v611 = vpop.f32.mrf.mxu0
  %v612 = vadd.f32 %v443, %v611
  %v613 = vpop.f32.mrf.mxu0
  %v614 = vadd.f32 %v445, %v613
  %615 = vmatmul.bf16.gmra.mxu0 %v339
  %v616 = vpop.f32.mrf.mxu0
  %v617 = vadd.f32 %v448, %v616
  %v618 = vpop.f32.mrf.mxu0
  %v619 = vadd.f32 %v450, %v618
  %620 = vmatmul.bf16.gmra.mxu0 %v342
  %v621 = vpop.f32.mrf.mxu0
  %v622 = vadd.f32 %v453, %v621
  %v623 = vpop.f32.mrf.mxu0
  %v624 = vadd.f32 %v455, %v623
  %625 = vmatmul.bf16.gmra.mxu0 %v345
  %v626 = vpop.f32.mrf.mxu0
  %v627 = vadd.f32 %v458, %v626
  %v628 = vpop.f32.mrf.mxu0
  %v629 = vadd.f32 %v460, %v628
  %630 = vmatmul.bf16.gmra.mxu0 %v348
  %v631 = vpop.f32.mrf.mxu0
  %v632 = vadd.f32 %v463, %v631
  %v633 = vpop.f32.mrf.mxu0
  %v634 = vadd.f32 %v465, %v633
  %635 = vmatmul.bf16.gmra.mxu0 %v351
  %v636 = vpop.f32.mrf.mxu0
  %v637 = vadd.f32 %v468, %v636
  %v638 = vpop.f32.mrf.mxu0
  %v639 = vadd.f32 %v470, %v638
  %640 = vmatmul.bf16.gmra.mxu0 %v354
  %v641 = vpop.f32.mrf.mxu0
  %v642 = vadd.f32 %v473, %v641
  %v643 = vpop.f32.mrf.mxu0
  %v644 = vadd.f32 %v475, %v643
  %645 = vmatmul.bf16.gmra.mxu0 %v357
  %v646 = vpop.f32.mrf.mxu0
  %v647 = vadd.f32 %v478, %v646
  %v648 = vpop.f32.mrf.mxu0
  %v649 = vadd.f32 %v480, %v648
  %650 = vmatmul.bf16.gmra.mxu0 %v360
  %v651 = vpop.f32.mrf.mxu0
  %v652 = vadd.f32 %v483, %v651
  %v653 = vpop.f32.mrf.mxu0
  %v654 = vadd.f32 %v485, %v653
  %655 = vmatmul.bf16.gmra.mxu0 %v363
  %v656 = vpop.f32.mrf.mxu0
  %v657 = vadd.f32 %v488, %v656
  %v658 = vpop.f32.mrf.mxu0
  %v659 = vadd.f32 %v490, %v658
  %660 = vmatmul.bf16.gmra.mxu0 %v366
  %v661 = vpop.f32.mrf.mxu0
  %v662 = vadd.f32 %v493, %v661
  %v663 = vpop.f32.mrf.mxu0
  %v664 = vadd.f32 %v495, %v663
  %665 = vmatmul.bf16.gmra.mxu0 %v369
  %v666 = vpop.f32.mrf.mxu0
  %v667 = vadd.f32 %v498, %v666
  %v668 = vpop.f32.mrf.mxu0
  %v669 = vadd.f32 %v500, %v668
  %670 = vmatmul.bf16.gmra.mxu0 %v372
  %v671 = vpop.f32.mrf.mxu0
  %v672 = vadd.f32 %v503, %v671
  %v673 = vpop.f32.mrf.mxu0
  %v674 = vadd.f32 %v505, %v673
  %675 = vmatmul.bf16.gmra.mxu0 %v375
  %v676 = vpop.f32.mrf.mxu0
  %v677 = vadd.f32 %v508, %v676
  %v678 = vpop.f32.mrf.mxu0
  %v679 = vadd.f32 %v510, %v678
  %680 = vmatmul.bf16.gmra.mxu0 %v378
  %v681 = vpop.f32.mrf.mxu0
  %v682 = vadd.f32 %v513, %v681
  %v683 = vpop.f32.mrf.mxu0
  %v684 = vadd.f32 %v515, %v683
  %685 = vmatmul.bf16.gmra.mxu0 %v381
  %v686 = vpop.f32.mrf.mxu0
  %v687 = vadd.f32 %v518, %v686
  %v688 = vpop.f32.mrf.mxu0
  %v689 = vadd.f32 %v520, %v688
  %690 = vmatmul.bf16.gmra.mxu0 %v384
  %v691 = vpop.f32.mrf.mxu0
  %v692 = vadd.f32 %v523, %v691
  %v693 = vpop.f32.mrf.mxu0
  %v694 = vadd.f32 %v525, %v693
  %695 = vmatmul.bf16.gmra.mxu0 %v387
  %v696 = vpop.f32.mrf.mxu0
  %v697 = vadd.f32 %v528, %v696
  %v698 = vpop.f32.mrf.mxu0
  %v699 = vadd.f32 %v530, %v698
  %700 = vmatmul.bf16.gmra.mxu0 %v390
  %v701 = vpop.f32.mrf.mxu0
  %v702 = vadd.f32 %v533, %v701
  %v703 = vpop.f32.mrf.mxu0
  %v704 = vadd.f32 %v535, %v703
  %705 = vmatmul.bf16.gmra.mxu0 %v393
  %v706 = vpop.f32.mrf.mxu0
  %v707 = vadd.f32 %v538, %v706
  %v708 = vpop.f32.mrf.mxu0
  %v709 = vadd.f32 %v540, %v708
  %710 = vmatmul.bf16.gmra.mxu0 %v396
  %v711 = vpop.f32.mrf.mxu0
  %v712 = vadd.f32 %v543, %v711
  %v713 = vpop.f32.mrf.mxu0
  %v714 = vadd.f32 %v545, %v713
  %715 = vmatmul.bf16.gmra.mxu0 %v399
  %v716 = vpop.f32.mrf.mxu0
  %v717 = vadd.f32 %v548, %v716
  %v718 = vpop.f32.mrf.mxu0
  %v719 = vadd.f32 %v550, %v718
  %720 = vmatmul.bf16.gmra.mxu0 %v402
  %v721 = vpop.f32.mrf.mxu0
  %v722 = vadd.f32 %v553, %v721
  %v723 = vpop.f32.mrf.mxu0
  %v724 = vadd.f32 %v555, %v723
  %725 = vmatmul.bf16.gmra.mxu0 %v405
  %v726 = vpop.f32.mrf.mxu0
  %v727 = vadd.f32 %v558, %v726
  %v728 = vpop.f32.mrf.mxu0
  %v729 = vadd.f32 %v560, %v728
  %730 = vmatmul.bf16.gmra.mxu0 %v408
  %v731 = vpop.f32.mrf.mxu0
  %v732 = vadd.f32 %v563, %v731
  %v733 = vpop.f32.mrf.mxu0
  %v734 = vadd.f32 %v565, %v733
  %735 = vmatmul.bf16.gmra.mxu0 %v411
  %v736 = vpop.f32.mrf.mxu0
  %v737 = vadd.f32 %v568, %v736
  %v738 = vpop.f32.mrf.mxu0
  %v739 = vadd.f32 %v570, %v738
  %740 = vmatmul.bf16.gmra.mxu0 %v414
  %v741 = vpop.f32.mrf.mxu0
  %v742 = vadd.f32 %v573, %v741
  %v743 = vpop.f32.mrf.mxu0
  %v744 = vadd.f32 %v575, %v743
  %745 = vmatmul.bf16.gmra.mxu0 %v417
  %v746 = vpop.f32.mrf.mxu0
  %v747 = vadd.f32 %v578, %v746
  %v748 = vpop.f32.mrf.mxu0
  %v749 = vadd.f32 %v580, %v748
  %750 = vmatmul.bf16.gmra.mxu0 %v420
  %v751 = vpop.f32.mrf.mxu0
  %v752 = vadd.f32 %v583, %v751
  %v753 = vpop.f32.mrf.mxu0
  %v754 = vadd.f32 %v585, %v753
  %755 = vmatmul.bf16.gmra.mxu0 %v423
  %v756 = vpop.f32.mrf.mxu0
  %v757 = vadd.f32 %v588, %v756
  %v758 = vpop.f32.mrf.mxu0
  %v759 = vadd.f32 %v590, %v758
  %760 = vmatmul.bf16.gmra.mxu0 %v426
  %v761 = vpop.f32.mrf.mxu0
  %v762 = vadd.f32 %v593, %v761
  %v763 = vpop.f32.mrf.mxu0
  %v764 = vadd.f32 %v595, %v763
  %765 = vdwg.mxu0
  %v766 = vmax.f32 %v607, 0.0
  %v767 = vmax.f32 %v609, 0.0
  %v768 = vmax.f32 %v612, 0.0
  %v769 = vmax.f32 %v614, 0.0
  %v770 = vmax.f32 %v617, 0.0
  %v771 = vmax.f32 %v619, 0.0
  %v772 = vmax.f32 %v622, 0.0
  %v773 = vmax.f32 %v624, 0.0
  %v774 = vmax.f32 %v627, 0.0
  %v775 = vmax.f32 %v629, 0.0
  %v776 = vmax.f32 %v632, 0.0
  %v777 = vmax.f32 %v634, 0.0
  %v778 = vmax.f32 %v637, 0.0
  %v779 = vmax.f32 %v639, 0.0
  %v780 = vmax.f32 %v642, 0.0
  %v781 = vmax.f32 %v644, 0.0
  %v782 = vmax.f32 %v647, 0.0
  %v783 = vmax.f32 %v649, 0.0
  %v784 = vmax.f32 %v652, 0.0
  %v785 = vmax.f32 %v654, 0.0
  %v786 = vmax.f32 %v657, 0.0
  %v787 = vmax.f32 %v659, 0.0
  %v788 = vmax.f32 %v662, 0.0
  %v789 = vmax.f32 %v664, 0.0
  %v790 = vmax.f32 %v667, 0.0
  %v791 = vmax.f32 %v669, 0.0
  %v792 = vmax.f32 %v672, 0.0
  %v793 = vmax.f32 %v674, 0.0
  %v794 = vmax.f32 %v677, 0.0
  %v795 = vmax.f32 %v679, 0.0
  %v796 = vmax.f32 %v682, 0.0
  %v797 = vmax.f32 %v684, 0.0
  %v798 = vmax.f32 %v687, 0.0
  %v799 = vmax.f32 %v689, 0.0
  %v800 = vmax.f32 %v692, 0.0
  %v801 = vmax.f32 %v694, 0.0
  %v802 = vmax.f32 %v697, 0.0
  %v803 = vmax.f32 %v699, 0.0
  %v804 = vmax.f32 %v702, 0.0
  %v805 = vmax.f32 %v704, 0.0
  %v806 = vmax.f32 %v707, 0.0
  %v807 = vmax.f32 %v709, 0.0
  %v808 = vmax.f32 %v712, 0.0
  %v809 = vmax.f32 %v714, 0.0
  %v810 = vmax.f32 %v717, 0.0
  %v811 = vmax.f32 %v719, 0.0
  %v812 = vmax.f32 %v722, 0.0
  %v813 = vmax.f32 %v724, 0.0
  %v814 = vmax.f32 %v727, 0.0
  %v815 = vmax.f32 %v729, 0.0
  %v816 = vmax.f32 %v732, 0.0
  %v817 = vmax.f32 %v734, 0.0
  %v818 = vmax.f32 %v737, 0.0
  %v819 = vmax.f32 %v739, 0.0
  %v820 = vmax.f32 %v742, 0.0
  %v821 = vmax.f32 %v744, 0.0
  %v822 = vmax.f32 %v747, 0.0
  %v823 = vmax.f32 %v749, 0.0
  %v824 = vmax.f32 %v752, 0.0
  %v825 = vmax.f32 %v754, 0.0
  %v826 = vmax.f32 %v757, 0.0
  %v827 = vmax.f32 %v759, 0.0
  %v828 = vmax.f32 %v762, 0.0
  %v829 = vmax.f32 %v764, 0.0
  %v830 = vpack.c.bf16 %v766, %v766
  %v831 = vpack.c.bf16 %v767, %v767
  %v832 = vpack.c.bf16 %v768, %v768
  %v833 = vpack.c.bf16 %v769, %v769
  %v834 = vpack.c.bf16 %v770, %v770
  %v835 = vpack.c.bf16 %v771, %v771
  %v836 = vpack.c.bf16 %v772, %v772
  %v837 = vpack.c.bf16 %v773, %v773
  %v838 = vpack.c.bf16 %v774, %v774
  %v839 = vpack.c.bf16 %v775, %v775
  %v840 = vpack.c.bf16 %v776, %v776
  %v841 = vpack.c.bf16 %v777, %v777
  %v842 = vpack.c.bf16 %v778, %v778
  %v843 = vpack.c.bf16 %v779, %v779
  %v844 = vpack.c.bf16 %v780, %v780
  %v845 = vpack.c.bf16 %v781, %v781
  %v846 = vpack.c.bf16 %v782, %v782
  %v847 = vpack.c.bf16 %v783, %v783
  %v848 = vpack.c.bf16 %v784, %v784
  %v849 = vpack.c.bf16 %v785, %v785
  %v850 = vpack.c.bf16 %v786, %v786
  %v851 = vpack.c.bf16 %v787, %v787
  %v852 = vpack.c.bf16 %v788, %v788
  %v853 = vpack.c.bf16 %v789, %v789
  %v854 = vpack.c.bf16 %v790, %v790
  %v855 = vpack.c.bf16 %v791, %v791
  %v856 = vpack.c.bf16 %v792, %v792
  %v857 = vpack.c.bf16 %v793, %v793
  %v858 = vpack.c.bf16 %v794, %v794
  %v859 = vpack.c.bf16 %v795, %v795
  %v860 = vpack.c.bf16 %v796, %v796
  %v861 = vpack.c.bf16 %v797, %v797
  %v862 = vpack.c.bf16 %v798, %v798
  %v863 = vpack.c.bf16 %v799, %v799
  %v864 = vpack.c.bf16 %v800, %v800
  %v865 = vpack.c.bf16 %v801, %v801
  %v866 = vpack.c.bf16 %v802, %v802
  %v867 = vpack.c.bf16 %v803, %v803
  %v868 = vpack.c.bf16 %v804, %v804
  %v869 = vpack.c.bf16 %v805, %v805
  %v870 = vpack.c.bf16 %v806, %v806
  %v871 = vpack.c.bf16 %v807, %v807
  %v872 = vpack.c.bf16 %v808, %v808
  %v873 = vpack.c.bf16 %v809, %v809
  %v874 = vpack.c.bf16 %v810, %v810
  %v875 = vpack.c.bf16 %v811, %v811
  %v876 = vpack.c.bf16 %v812, %v812
  %v877 = vpack.c.bf16 %v813, %v813
  %v878 = vpack.c.bf16 %v814, %v814
  %v879 = vpack.c.bf16 %v815, %v815
  %v880 = vpack.c.bf16 %v816, %v816
  %v881 = vpack.c.bf16 %v817, %v817
  %v882 = vpack.c.bf16 %v818, %v818
  %v883 = vpack.c.bf16 %v819, %v819
  %v884 = vpack.c.bf16 %v820, %v820
  %v885 = vpack.c.bf16 %v821, %v821
  %v886 = vpack.c.bf16 %v822, %v822
  %v887 = vpack.c.bf16 %v823, %v823
  %v888 = vpack.c.bf16 %v824, %v824
  %v889 = vpack.c.bf16 %v825, %v825
  %v890 = vpack.c.bf16 %v826, %v826
  %v891 = vpack.c.bf16 %v827, %v827
  %v892 = vpack.c.bf16 %v828, %v828
  %v893 = vpack.c.bf16 %v829, %v829
  %v895 = vunpack.c.l.b16 %v831
  %v896 = vpack.c.b16 %v895, %v895
  %897 = vrot.lane.b32.xlu0 %v896, 32
  %v898 = vpop.permute.xlu0 %897
  %v900 = vunpack.c.l.b16 %v832
  %v901 = vpack.c.b16 %v900, %v900
  %902 = vrot.lane.b32.xlu0 %v901, 64
  %v903 = vpop.permute.xlu0 %902
  %v905 = vunpack.c.l.b16 %v833
  %v906 = vpack.c.b16 %v905, %v905
  %907 = vrot.lane.b32.xlu0 %v906, 96
  %v908 = vpop.permute.xlu0 %907
  %v910 = vunpack.c.l.b16 %v839
  %v911 = vpack.c.b16 %v910, %v910
  %912 = vrot.lane.b32.xlu0 %v911, 32
  %v913 = vpop.permute.xlu0 %912
  %v915 = vunpack.c.l.b16 %v840
  %v916 = vpack.c.b16 %v915, %v915
  %917 = vrot.lane.b32.xlu0 %v916, 64
  %v918 = vpop.permute.xlu0 %917
  %v920 = vunpack.c.l.b16 %v841
  %v921 = vpack.c.b16 %v920, %v920
  %922 = vrot.lane.b32.xlu0 %v921, 96
  %v923 = vpop.permute.xlu0 %922
  %v925 = vunpack.c.l.b16 %v847
  %v926 = vpack.c.b16 %v925, %v925
  %927 = vrot.lane.b32.xlu0 %v926, 32
  %v928 = vpop.permute.xlu0 %927
  %v930 = vunpack.c.l.b16 %v848
  %v931 = vpack.c.b16 %v930, %v930
  %932 = vrot.lane.b32.xlu0 %v931, 64
  %v933 = vpop.permute.xlu0 %932
  %v935 = vunpack.c.l.b16 %v849
  %v936 = vpack.c.b16 %v935, %v935
  %937 = vrot.lane.b32.xlu0 %v936, 96
  %v938 = vpop.permute.xlu0 %937
  %v940 = vunpack.c.l.b16 %v855
  %v941 = vpack.c.b16 %v940, %v940
  %942 = vrot.lane.b32.xlu0 %v941, 32
  %v943 = vpop.permute.xlu0 %942
  %v945 = vunpack.c.l.b16 %v856
  %v946 = vpack.c.b16 %v945, %v945
  %947 = vrot.lane.b32.xlu0 %v946, 64
  %v948 = vpop.permute.xlu0 %947
  %v950 = vunpack.c.l.b16 %v857
  %v951 = vpack.c.b16 %v950, %v950
  %952 = vrot.lane.b32.xlu0 %v951, 96
  %v953 = vpop.permute.xlu0 %952
  %vm954 = vcmask 261120
  %v957 = vsel %vm954, %v830, %v898
  %v959 = vsel %vm331, %v957, %v903
  %vm960 = vcmask 785408
  %v962 = vsel %vm960, %v959, %v908
  %v965 = vsel %vm954, %v838, %v913
  %v967 = vsel %vm331, %v965, %v918
  %v969 = vsel %vm960, %v967, %v923
  %v972 = vsel %vm954, %v846, %v928
  %v974 = vsel %vm331, %v972, %v933
  %v976 = vsel %vm960, %v974, %v938
  %v979 = vsel %vm954, %v854, %v943
  %v981 = vsel %vm331, %v979, %v948
  %v983 = vsel %vm960, %v981, %v953
  %984 = vrot.lane.b32.xlu0 %v906, 32
  %v985 = vpop.permute.xlu0 %984
  %v987 = vunpack.c.l.b16 %v834
  %v988 = vpack.c.b16 %v987, %v987
  %989 = vrot.lane.b32.xlu0 %v988, 64
  %v990 = vpop.permute.xlu0 %989
  %v992 = vunpack.c.l.b16 %v835
  %v993 = vpack.c.b16 %v992, %v992
  %994 = vrot.lane.b32.xlu0 %v993, 96
  %v995 = vpop.permute.xlu0 %994
  %996 = vrot.lane.b32.xlu0 %v921, 32
  %v997 = vpop.permute.xlu0 %996
  %v999 = vunpack.c.l.b16 %v842
  %v1000 = vpack.c.b16 %v999, %v999
  %1001 = vrot.lane.b32.xlu0 %v1000, 64
  %v1002 = vpop.permute.xlu0 %1001
  %v1004 = vunpack.c.l.b16 %v843
  %v1005 = vpack.c.b16 %v1004, %v1004
  %1006 = vrot.lane.b32.xlu0 %v1005, 96
  %v1007 = vpop.permute.xlu0 %1006
  %1008 = vrot.lane.b32.xlu0 %v936, 32
  %v1009 = vpop.permute.xlu0 %1008
  %v1011 = vunpack.c.l.b16 %v850
  %v1012 = vpack.c.b16 %v1011, %v1011
  %1013 = vrot.lane.b32.xlu0 %v1012, 64
  %v1014 = vpop.permute.xlu0 %1013
  %v1016 = vunpack.c.l.b16 %v851
  %v1017 = vpack.c.b16 %v1016, %v1016
  %1018 = vrot.lane.b32.xlu0 %v1017, 96
  %v1019 = vpop.permute.xlu0 %1018
  %1020 = vrot.lane.b32.xlu0 %v951, 32
  %v1021 = vpop.permute.xlu0 %1020
  %v1023 = vunpack.c.l.b16 %v858
  %v1024 = vpack.c.b16 %v1023, %v1023
  %1025 = vrot.lane.b32.xlu0 %v1024, 64
  %v1026 = vpop.permute.xlu0 %1025
  %v1028 = vunpack.c.l.b16 %v859
  %v1029 = vpack.c.b16 %v1028, %v1028
  %1030 = vrot.lane.b32.xlu0 %v1029, 96
  %v1031 = vpop.permute.xlu0 %1030
  %v1034 = vsel %vm954, %v832, %v985
  %v1036 = vsel %vm331, %v1034, %v990
  %v1038 = vsel %vm960, %v1036, %v995
  %v1041 = vsel %vm954, %v840, %v997
  %v1043 = vsel %vm331, %v1041, %v1002
  %v1045 = vsel %vm960, %v1043, %v1007
  %v1048 = vsel %vm954, %v848, %v1009
  %v1050 = vsel %vm331, %v1048, %v1014
  %v1052 = vsel %vm960, %v1050, %v1019
  %v1055 = vsel %vm954, %v856, %v1021
  %v1057 = vsel %vm331, %v1055, %v1026
  %v1059 = vsel %vm960, %v1057, %v1031
  %1060 = vrot.lane.b32.xlu0 %v993, 32
  %v1061 = vpop.permute.xlu0 %1060
  %v1063 = vunpack.c.l.b16 %v836
  %v1064 = vpack.c.b16 %v1063, %v1063
  %1065 = vrot.lane.b32.xlu0 %v1064, 64
  %v1066 = vpop.permute.xlu0 %1065
  %v1068 = vunpack.c.l.b16 %v837
  %v1069 = vpack.c.b16 %v1068, %v1068
  %1070 = vrot.lane.b32.xlu0 %v1069, 96
  %v1071 = vpop.permute.xlu0 %1070
  %1072 = vrot.lane.b32.xlu0 %v1005, 32
  %v1073 = vpop.permute.xlu0 %1072
  %v1075 = vunpack.c.l.b16 %v844
  %v1076 = vpack.c.b16 %v1075, %v1075
  %1077 = vrot.lane.b32.xlu0 %v1076, 64
  %v1078 = vpop.permute.xlu0 %1077
  %v1080 = vunpack.c.l.b16 %v845
  %v1081 = vpack.c.b16 %v1080, %v1080
  %1082 = vrot.lane.b32.xlu0 %v1081, 96
  %v1083 = vpop.permute.xlu0 %1082
  %1084 = vrot.lane.b32.xlu0 %v1017, 32
  %v1085 = vpop.permute.xlu0 %1084
  %v1087 = vunpack.c.l.b16 %v852
  %v1088 = vpack.c.b16 %v1087, %v1087
  %1089 = vrot.lane.b32.xlu0 %v1088, 64
  %v1090 = vpop.permute.xlu0 %1089
  %v1092 = vunpack.c.l.b16 %v853
  %v1093 = vpack.c.b16 %v1092, %v1092
  %1094 = vrot.lane.b32.xlu0 %v1093, 96
  %v1095 = vpop.permute.xlu0 %1094
  %1096 = vrot.lane.b32.xlu0 %v1029, 32
  %v1097 = vpop.permute.xlu0 %1096
  %v1099 = vunpack.c.l.b16 %v860
  %v1100 = vpack.c.b16 %v1099, %v1099
  %1101 = vrot.lane.b32.xlu0 %v1100, 64
  %v1102 = vpop.permute.xlu0 %1101
  %v1104 = vunpack.c.l.b16 %v861
  %v1105 = vpack.c.b16 %v1104, %v1104
  %1106 = vrot.lane.b32.xlu0 %v1105, 96
  %v1107 = vpop.permute.xlu0 %1106
  %v1110 = vsel %vm954, %v834, %v1061
  %v1112 = vsel %vm331, %v1110, %v1066
  %v1114 = vsel %vm960, %v1112, %v1071
  %v1117 = vsel %vm954, %v842, %v1073
  %v1119 = vsel %vm331, %v1117, %v1078
  %v1121 = vsel %vm960, %v1119, %v1083
  %v1124 = vsel %vm954, %v850, %v1085
  %v1126 = vsel %vm331, %v1124, %v1090
  %v1128 = vsel %vm960, %v1126, %v1095
  %v1131 = vsel %vm954, %v858, %v1097
  %v1133 = vsel %vm331, %v1131, %v1102
  %v1135 = vsel %vm960, %v1133, %v1107
  %v1137 = vunpack.c.l.b16 %v863
  %v1138 = vpack.c.b16 %v1137, %v1137
  %1139 = vrot.lane.b32.xlu0 %v1138, 32
  %v1140 = vpop.permute.xlu0 %1139
  %v1142 = vunpack.c.l.b16 %v864
  %v1143 = vpack.c.b16 %v1142, %v1142
  %1144 = vrot.lane.b32.xlu0 %v1143, 64
  %v1145 = vpop.permute.xlu0 %1144
  %v1147 = vunpack.c.l.b16 %v865
  %v1148 = vpack.c.b16 %v1147, %v1147
  %1149 = vrot.lane.b32.xlu0 %v1148, 96
  %v1150 = vpop.permute.xlu0 %1149
  %v1152 = vunpack.c.l.b16 %v871
  %v1153 = vpack.c.b16 %v1152, %v1152
  %1154 = vrot.lane.b32.xlu0 %v1153, 32
  %v1155 = vpop.permute.xlu0 %1154
  %v1157 = vunpack.c.l.b16 %v872
  %v1158 = vpack.c.b16 %v1157, %v1157
  %1159 = vrot.lane.b32.xlu0 %v1158, 64
  %v1160 = vpop.permute.xlu0 %1159
  %v1162 = vunpack.c.l.b16 %v873
  %v1163 = vpack.c.b16 %v1162, %v1162
  %1164 = vrot.lane.b32.xlu0 %v1163, 96
  %v1165 = vpop.permute.xlu0 %1164
  %v1168 = vsel %vm954, %v862, %v1140
  %v1170 = vsel %vm331, %v1168, %v1145
  %v1172 = vsel %vm960, %v1170, %v1150
  %v1175 = vsel %vm954, %v870, %v1155
  %v1177 = vsel %vm331, %v1175, %v1160
  %v1179 = vsel %vm960, %v1177, %v1165
  %1180 = vrot.lane.b32.xlu0 %v1148, 32
  %v1181 = vpop.permute.xlu0 %1180
  %v1183 = vunpack.c.l.b16 %v866
  %v1184 = vpack.c.b16 %v1183, %v1183
  %1185 = vrot.lane.b32.xlu0 %v1184, 64
  %v1186 = vpop.permute.xlu0 %1185
  %v1188 = vunpack.c.l.b16 %v867
  %v1189 = vpack.c.b16 %v1188, %v1188
  %1190 = vrot.lane.b32.xlu0 %v1189, 96
  %v1191 = vpop.permute.xlu0 %1190
  %1192 = vrot.lane.b32.xlu0 %v1163, 32
  %v1193 = vpop.permute.xlu0 %1192
  %v1195 = vunpack.c.l.b16 %v874
  %v1196 = vpack.c.b16 %v1195, %v1195
  %1197 = vrot.lane.b32.xlu0 %v1196, 64
  %v1198 = vpop.permute.xlu0 %1197
  %v1200 = vunpack.c.l.b16 %v875
  %v1201 = vpack.c.b16 %v1200, %v1200
  %1202 = vrot.lane.b32.xlu0 %v1201, 96
  %v1203 = vpop.permute.xlu0 %1202
  %v1206 = vsel %vm954, %v864, %v1181
  %v1208 = vsel %vm331, %v1206, %v1186
  %v1210 = vsel %vm960, %v1208, %v1191
  %v1213 = vsel %vm954, %v872, %v1193
  %v1215 = vsel %vm331, %v1213, %v1198
  %v1217 = vsel %vm960, %v1215, %v1203
  %1218 = vrot.lane.b32.xlu0 %v1189, 32
  %v1219 = vpop.permute.xlu0 %1218
  %v1221 = vunpack.c.l.b16 %v868
  %v1222 = vpack.c.b16 %v1221, %v1221
  %1223 = vrot.lane.b32.xlu0 %v1222, 64
  %v1224 = vpop.permute.xlu0 %1223
  %v1226 = vunpack.c.l.b16 %v869
  %v1227 = vpack.c.b16 %v1226, %v1226
  %1228 = vrot.lane.b32.xlu0 %v1227, 96
  %v1229 = vpop.permute.xlu0 %1228
  %1230 = vrot.lane.b32.xlu0 %v1201, 32
  %v1231 = vpop.permute.xlu0 %1230
  %v1233 = vunpack.c.l.b16 %v876
  %v1234 = vpack.c.b16 %v1233, %v1233
  %1235 = vrot.lane.b32.xlu0 %v1234, 64
  %v1236 = vpop.permute.xlu0 %1235
  %v1238 = vunpack.c.l.b16 %v877
  %v1239 = vpack.c.b16 %v1238, %v1238
  %1240 = vrot.lane.b32.xlu0 %v1239, 96
  %v1241 = vpop.permute.xlu0 %1240
  %v1244 = vsel %vm954, %v866, %v1219
  %v1246 = vsel %vm331, %v1244, %v1224
  %v1248 = vsel %vm960, %v1246, %v1229
  %v1251 = vsel %vm954, %v874, %v1231
  %v1253 = vsel %vm331, %v1251, %v1236
  %v1255 = vsel %vm960, %v1253, %v1241
  %v1257 = vunpack.c.l.b16 %v879
  %v1258 = vpack.c.b16 %v1257, %v1257
  %1259 = vrot.lane.b32.xlu0 %v1258, 32
  %v1260 = vpop.permute.xlu0 %1259
  %v1262 = vunpack.c.l.b16 %v880
  %v1263 = vpack.c.b16 %v1262, %v1262
  %1264 = vrot.lane.b32.xlu0 %v1263, 64
  %v1265 = vpop.permute.xlu0 %1264
  %v1267 = vunpack.c.l.b16 %v881
  %v1268 = vpack.c.b16 %v1267, %v1267
  %1269 = vrot.lane.b32.xlu0 %v1268, 96
  %v1270 = vpop.permute.xlu0 %1269
  %v1272 = vunpack.c.l.b16 %v887
  %v1273 = vpack.c.b16 %v1272, %v1272
  %1274 = vrot.lane.b32.xlu0 %v1273, 32
  %v1275 = vpop.permute.xlu0 %1274
  %v1277 = vunpack.c.l.b16 %v888
  %v1278 = vpack.c.b16 %v1277, %v1277
  %1279 = vrot.lane.b32.xlu0 %v1278, 64
  %v1280 = vpop.permute.xlu0 %1279
  %v1282 = vunpack.c.l.b16 %v889
  %v1283 = vpack.c.b16 %v1282, %v1282
  %1284 = vrot.lane.b32.xlu0 %v1283, 96
  %v1285 = vpop.permute.xlu0 %1284
  %v1288 = vsel %vm954, %v878, %v1260
  %v1290 = vsel %vm331, %v1288, %v1265
  %v1292 = vsel %vm960, %v1290, %v1270
  %v1295 = vsel %vm954, %v886, %v1275
  %v1297 = vsel %vm331, %v1295, %v1280
  %v1299 = vsel %vm960, %v1297, %v1285
  %1300 = vrot.lane.b32.xlu0 %v1268, 32
  %v1301 = vpop.permute.xlu0 %1300
  %v1303 = vunpack.c.l.b16 %v882
  %v1304 = vpack.c.b16 %v1303, %v1303
  %1305 = vrot.lane.b32.xlu0 %v1304, 64
  %v1306 = vpop.permute.xlu0 %1305
  %v1308 = vunpack.c.l.b16 %v883
  %v1309 = vpack.c.b16 %v1308, %v1308
  %1310 = vrot.lane.b32.xlu0 %v1309, 96
  %v1311 = vpop.permute.xlu0 %1310
  %1312 = vrot.lane.b32.xlu0 %v1283, 32
  %v1313 = vpop.permute.xlu0 %1312
  %v1315 = vunpack.c.l.b16 %v890
  %v1316 = vpack.c.b16 %v1315, %v1315
  %1317 = vrot.lane.b32.xlu0 %v1316, 64
  %v1318 = vpop.permute.xlu0 %1317
  %v1320 = vunpack.c.l.b16 %v891
  %v1321 = vpack.c.b16 %v1320, %v1320
  %1322 = vrot.lane.b32.xlu0 %v1321, 96
  %v1323 = vpop.permute.xlu0 %1322
  %v1326 = vsel %vm954, %v880, %v1301
  %v1328 = vsel %vm331, %v1326, %v1306
  %v1330 = vsel %vm960, %v1328, %v1311
  %v1333 = vsel %vm954, %v888, %v1313
  %v1335 = vsel %vm331, %v1333, %v1318
  %v1337 = vsel %vm960, %v1335, %v1323
  %1338 = vrot.lane.b32.xlu0 %v1309, 32
  %v1339 = vpop.permute.xlu0 %1338
  %v1341 = vunpack.c.l.b16 %v884
  %v1342 = vpack.c.b16 %v1341, %v1341
  %1343 = vrot.lane.b32.xlu0 %v1342, 64
  %v1344 = vpop.permute.xlu0 %1343
  %v1346 = vunpack.c.l.b16 %v885
  %v1347 = vpack.c.b16 %v1346, %v1346
  %1348 = vrot.lane.b32.xlu0 %v1347, 96
  %v1349 = vpop.permute.xlu0 %1348
  %1350 = vrot.lane.b32.xlu0 %v1321, 32
  %v1351 = vpop.permute.xlu0 %1350
  %v1353 = vunpack.c.l.b16 %v892
  %v1354 = vpack.c.b16 %v1353, %v1353
  %1355 = vrot.lane.b32.xlu0 %v1354, 64
  %v1356 = vpop.permute.xlu0 %1355
  %v1358 = vunpack.c.l.b16 %v893
  %v1359 = vpack.c.b16 %v1358, %v1358
  %1360 = vrot.lane.b32.xlu0 %v1359, 96
  %v1361 = vpop.permute.xlu0 %1360
  %v1366 = vsel %vm954, %v882, %v1339
  %v1368 = vsel %vm331, %v1366, %v1344
  %v1370 = vsel %vm960, %v1368, %v1349
  %v1374 = vsel %vm954, %v890, %v1351
  %v1376 = vsel %vm331, %v1374, %v1356
  %v1378 = vsel %vm960, %v1376, %v1361
  %v1384 = vrot.slane %v1038, 4
  %v1385 = vrot.slane %v1045, 4
  %v1386 = vrot.slane %v1052, 4
  %v1387 = vrot.slane %v1059, 4
  %v1392 = vrot.slane %v976, 4
  %v1393 = vrot.slane %v983, 4
  %v1394 = vrot.slane %v1172, 4
  %v1395 = vrot.slane %v1179, 4
  %v1400 = vrot.slane %v1128, 4
  %v1401 = vrot.slane %v1135, 4
  %v1402 = vrot.slane %v1248, 4
  %v1403 = vrot.slane %v1255, 4
  %v1408 = vrot.slane %v1210, 4
  %v1409 = vrot.slane %v1217, 4
  %v1410 = vrot.slane %v1330, 4
  %v1411 = vrot.slane %v1337, 4
  %vm1412 = vcmask 1043456
  %v1414 = vsel %vm1412, %v962, %v1384
  %v1417 = vsel %vm1412, %v969, %v1385
  %v1420 = vsel %vm1412, %v976, %v1386
  %v1423 = vsel %vm1412, %v983, %v1387
  %v1426 = vsel %vm1412, %v1114, %v1392
  %v1429 = vsel %vm1412, %v1121, %v1393
  %v1432 = vsel %vm1412, %v1128, %v1394
  %v1435 = vsel %vm1412, %v1135, %v1395
  %v1438 = vsel %vm1412, %v1052, %v1400
  %v1441 = vsel %vm1412, %v1059, %v1401
  %v1444 = vsel %vm1412, %v1210, %v1402
  %v1447 = vsel %vm1412, %v1217, %v1403
  %v1450 = vsel %vm1412, %v1172, %v1408
  %v1453 = vsel %vm1412, %v1179, %v1409
  %v1456 = vsel %vm1412, %v1292, %v1410
  %v1459 = vsel %vm1412, %v1299, %v1411
  %v1461 = vld [vmem:[%s3] sm:$0xf]
  %v1462 = vld [vmem:[%s3 + $0x4] sm:$0xf]
  %v1463 = vld [vmem:[%s3 + $0x8] sm:$0xf]
  %v1464 = vld [vmem:[%s3 + $0xc] sm:$0xf]
  %v1465 = vld [vmem:[%s3 + $0x10] sm:$0xf]
  %v1466 = vld [vmem:[%s3 + $0x14] sm:$0xf]
  %v1467 = vld [vmem:[%s3 + $0x18] sm:$0xf]
  %v1468 = vld [vmem:[%s3 + $0x1c] sm:$0xf]
  %v1469 = vld [vmem:[%s3 + $0x20] sm:$0xf]
  %v1470 = vld [vmem:[%s3 + $0x24] sm:$0xf]
  %v1471 = vld [vmem:[%s3 + $0x28] sm:$0xf]
  %v1472 = vld [vmem:[%s3 + $0x2c] sm:$0xf]
  %v1473 = vld [vmem:[%s3 + $0x30] sm:$0xf]
  %v1474 = vld [vmem:[%s3 + $0x34] sm:$0xf]
  %v1475 = vld [vmem:[%s3 + $0x38] sm:$0xf]
  %v1476 = vld [vmem:[%s3 + $0x3c] sm:$0xf]
  %v1477 = vld [vmem:[%s3 + $0x40] sm:$0xf]
  %v1478 = vld [vmem:[%s3 + $0x44] sm:$0xf]
  %v1479 = vld [vmem:[%s3 + $0x48] sm:$0xf]
  %v1480 = vld [vmem:[%s3 + $0x4c] sm:$0xf]
  %v1481 = vld [vmem:[%s3 + $0x50] sm:$0xf]
  %v1482 = vld [vmem:[%s3 + $0x54] sm:$0xf]
  %v1483 = vld [vmem:[%s3 + $0x58] sm:$0xf]
  %v1484 = vld [vmem:[%s3 + $0x5c] sm:$0xf]
  %v1485 = vld [vmem:[%s3 + $0x60] sm:$0xf]
  %v1486 = vld [vmem:[%s3 + $0x64] sm:$0xf]
  %v1487 = vld [vmem:[%s3 + $0x68] sm:$0xf]
  %v1488 = vld [vmem:[%s3 + $0x6c] sm:$0xf]
  %v1489 = vld [vmem:[%s3 + $0x70] sm:$0xf]
  %v1490 = vld [vmem:[%s3 + $0x74] sm:$0xf]
  %v1491 = vld [vmem:[%s3 + $0x78] sm:$0xf]
  %v1492 = vld [vmem:[%s3 + $0x7c] sm:$0xf]
  %v1493 = vld [vmem:[%s3 + $0x80] sm:$0xf]
  %v1494 = vld [vmem:[%s3 + $0x84] sm:$0xf]
  %v1495 = vld [vmem:[%s3 + $0x88] sm:$0xf]
  %v1496 = vld [vmem:[%s3 + $0x8c] sm:$0xf]
  %v1497 = vld [vmem:[%s3 + $0x90] sm:$0xf]
  %v1498 = vld [vmem:[%s3 + $0x94] sm:$0xf]
  %v1499 = vld [vmem:[%s3 + $0x98] sm:$0xf]
  %v1500 = vld [vmem:[%s3 + $0x9c] sm:$0xf]
  %v1501 = vld [vmem:[%s3 + $0xa0] sm:$0xf]
  %v1502 = vld [vmem:[%s3 + $0xa4] sm:$0xf]
  %v1503 = vld [vmem:[%s3 + $0xa8] sm:$0xf]
  %v1504 = vld [vmem:[%s3 + $0xac] sm:$0xf]
  %v1505 = vld [vmem:[%s3 + $0xb0] sm:$0xf]
  %v1506 = vld [vmem:[%s3 + $0xb4] sm:$0xf]
  %v1507 = vld [vmem:[%s3 + $0xb8] sm:$0xf]
  %v1508 = vld [vmem:[%s3 + $0xbc] sm:$0xf]
  %v1509 = vld [vmem:[%s3 + $0xc0] sm:$0xf]
  %v1510 = vld [vmem:[%s3 + $0xc4] sm:$0xf]
  %v1511 = vld [vmem:[%s3 + $0xc8] sm:$0xf]
  %v1512 = vld [vmem:[%s3 + $0xcc] sm:$0xf]
  %v1513 = vld [vmem:[%s3 + $0xd0] sm:$0xf]
  %v1514 = vld [vmem:[%s3 + $0xd4] sm:$0xf]
  %v1515 = vld [vmem:[%s3 + $0xd8] sm:$0xf]
  %v1516 = vld [vmem:[%s3 + $0xdc] sm:$0xf]
  %v1517 = vld [vmem:[%s3 + $0xe0] sm:$0xf]
  %v1518 = vld [vmem:[%s3 + $0xe4] sm:$0xf]
  %v1519 = vld [vmem:[%s3 + $0xe8] sm:$0xf]
  %v1520 = vld [vmem:[%s3 + $0xec] sm:$0xf]
  %v1521 = vld [vmem:[%s3 + $0xf0] sm:$0xf]
  %v1522 = vld [vmem:[%s3 + $0xf4] sm:$0xf]
  %v1523 = vld [vmem:[%s3 + $0xf8] sm:$0xf]
  %v1524 = vld [vmem:[%s3 + $0xfc] sm:$0xf]
  %v1525 = vld [vmem:[%s4] sm:$0x1]
  %v1527 = vperm.slane %v1525, 0
  %v1593 = vunpack.c.l.b16 %v1461
  %v1594 = vunpack.c.l.b16 %v1462
  %v1595 = vunpack.c.l.b16 %v1463
  %v1596 = vunpack.c.l.b16 %v1464
  %v1597 = vunpack.c.l.b16 %v1465
  %v1598 = vunpack.c.l.b16 %v1466
  %v1599 = vunpack.c.l.b16 %v1467
  %v1600 = vunpack.c.l.b16 %v1468
  %v1601 = vunpack.c.l.b16 %v1469
  %v1602 = vunpack.c.l.b16 %v1470
  %v1603 = vunpack.c.l.b16 %v1471
  %v1604 = vunpack.c.l.b16 %v1472
  %v1605 = vunpack.c.l.b16 %v1473
  %v1606 = vunpack.c.l.b16 %v1474
  %v1607 = vunpack.c.l.b16 %v1475
  %v1608 = vunpack.c.l.b16 %v1476
  %v1609 = vunpack.c.l.b16 %v1477
  %v1610 = vunpack.c.l.b16 %v1478
  %v1611 = vunpack.c.l.b16 %v1479
  %v1612 = vunpack.c.l.b16 %v1480
  %v1613 = vunpack.c.l.b16 %v1481
  %v1614 = vunpack.c.l.b16 %v1482
  %v1615 = vunpack.c.l.b16 %v1483
  %v1616 = vunpack.c.l.b16 %v1484
  %v1617 = vunpack.c.l.b16 %v1485
  %v1618 = vunpack.c.l.b16 %v1486
  %v1619 = vunpack.c.l.b16 %v1487
  %v1620 = vunpack.c.l.b16 %v1488
  %v1621 = vunpack.c.l.b16 %v1489
  %v1622 = vunpack.c.l.b16 %v1490
  %v1623 = vunpack.c.l.b16 %v1491
  %v1624 = vunpack.c.l.b16 %v1492
  %v1625 = vunpack.c.l.b16 %v1493
  %v1626 = vunpack.c.l.b16 %v1494
  %v1627 = vunpack.c.l.b16 %v1495
  %v1628 = vunpack.c.l.b16 %v1496
  %v1629 = vunpack.c.l.b16 %v1497
  %v1630 = vunpack.c.l.b16 %v1498
  %v1631 = vunpack.c.l.b16 %v1499
  %v1632 = vunpack.c.l.b16 %v1500
  %v1633 = vunpack.c.l.b16 %v1501
  %v1634 = vunpack.c.l.b16 %v1502
  %v1635 = vunpack.c.l.b16 %v1503
  %v1636 = vunpack.c.l.b16 %v1504
  %v1637 = vunpack.c.l.b16 %v1505
  %v1638 = vunpack.c.l.b16 %v1506
  %v1639 = vunpack.c.l.b16 %v1507
  %v1640 = vunpack.c.l.b16 %v1508
  %v1641 = vunpack.c.l.b16 %v1509
  %v1642 = vunpack.c.l.b16 %v1510
  %v1643 = vunpack.c.l.b16 %v1511
  %v1644 = vunpack.c.l.b16 %v1512
  %v1645 = vunpack.c.l.b16 %v1513
  %v1646 = vunpack.c.l.b16 %v1514
  %v1647 = vunpack.c.l.b16 %v1515
  %v1648 = vunpack.c.l.b16 %v1516
  %v1649 = vunpack.c.l.b16 %v1517
  %v1650 = vunpack.c.l.b16 %v1518
  %v1651 = vunpack.c.l.b16 %v1519
  %v1652 = vunpack.c.l.b16 %v1520
  %v1653 = vunpack.c.l.b16 %v1521
  %v1654 = vunpack.c.l.b16 %v1522
  %v1655 = vunpack.c.l.b16 %v1523
  %v1656 = vunpack.c.l.b16 %v1524
  %v1657 = vpack.c.b16 %v1594, %v1593
  %v1658 = vpack.c.b16 %v1596, %v1595
  %v1659 = vpack.c.b16 %v1598, %v1597
  %v1660 = vpack.c.b16 %v1600, %v1599
  %v1661 = vpack.c.b16 %v1602, %v1601
  %v1662 = vpack.c.b16 %v1604, %v1603
  %v1663 = vpack.c.b16 %v1606, %v1605
  %v1664 = vpack.c.b16 %v1608, %v1607
  %v1665 = vpack.c.b16 %v1610, %v1609
  %v1666 = vpack.c.b16 %v1612, %v1611
  %v1667 = vpack.c.b16 %v1614, %v1613
  %v1668 = vpack.c.b16 %v1616, %v1615
  %v1669 = vpack.c.b16 %v1618, %v1617
  %v1670 = vpack.c.b16 %v1620, %v1619
  %v1671 = vpack.c.b16 %v1622, %v1621
  %v1672 = vpack.c.b16 %v1624, %v1623
  %v1673 = vpack.c.b16 %v1626, %v1625
  %v1674 = vpack.c.b16 %v1628, %v1627
  %v1675 = vpack.c.b16 %v1630, %v1629
  %v1676 = vpack.c.b16 %v1632, %v1631
  %v1677 = vpack.c.b16 %v1634, %v1633
  %v1678 = vpack.c.b16 %v1636, %v1635
  %v1679 = vpack.c.b16 %v1638, %v1637
  %v1680 = vpack.c.b16 %v1640, %v1639
  %v1681 = vpack.c.b16 %v1642, %v1641
  %v1682 = vpack.c.b16 %v1644, %v1643
  %v1683 = vpack.c.b16 %v1646, %v1645
  %v1684 = vpack.c.b16 %v1648, %v1647
  %v1685 = vpack.c.b16 %v1650, %v1649
  %v1686 = vpack.c.b16 %v1652, %v1651
  %v1687 = vpack.c.b16 %v1654, %v1653
  %v1688 = vpack.c.b16 %v1656, %v1655
  %1721 = vmatpush.bf16.msra.mxu0 %v1664
  %1722 = vmatpush.bf16.msra.mxu0 %v1663
  %1723 = vmatpush.bf16.msra.mxu0 %v1662
  %1724 = vmatpush.bf16.msra.mxu0 %v1661
  %1725 = vmatpush.bf16.msra.mxu0 %v1660
  %1726 = vmatpush.bf16.msra.mxu0 %v1659
  %1727 = vmatpush.bf16.msra.mxu0 %v1658
  %1728 = vmatpush.bf16.msra.mxu0 %v1657
  %1729 = vmatmul.bf16.gmra.mxu0 %v1414
  %v1730 = vpop.f32.mrf.mxu0
  %v1731 = vadd.f32 %v1527, %v1730
  %v1732 = vpop.f32.mrf.mxu0
  %v1733 = vadd.f32 %v1527, %v1732
  %1734 = vmatmul.bf16.gmra.mxu0 %v1426
  %v1735 = vpop.f32.mrf.mxu0
  %v1736 = vadd.f32 %v1527, %v1735
  %v1737 = vpop.f32.mrf.mxu0
  %v1738 = vadd.f32 %v1527, %v1737
  %1739 = vmatmul.bf16.gmra.mxu0 %v1438
  %v1740 = vpop.f32.mrf.mxu0
  %v1741 = vadd.f32 %v1527, %v1740
  %v1742 = vpop.f32.mrf.mxu0
  %v1743 = vadd.f32 %v1527, %v1742
  %1744 = vmatmul.bf16.gmra.mxu0 %v1450
  %v1745 = vpop.f32.mrf.mxu0
  %v1746 = vadd.f32 %v1527, %v1745
  %v1747 = vpop.f32.mrf.mxu0
  %v1748 = vadd.f32 %v1527, %v1747
  %1749 = vmatmul.bf16.gmra.mxu0 %v1248
  %v1750 = vpop.f32.mrf.mxu0
  %v1751 = vadd.f32 %v1527, %v1750
  %v1752 = vpop.f32.mrf.mxu0
  %1753 = vdwg.mxu0
  %1754 = vmatpush.bf16.msra.mxu0 %v1672
  %1755 = vmatpush.bf16.msra.mxu0 %v1671
  %1756 = vmatpush.bf16.msra.mxu0 %v1670
  %1757 = vmatpush.bf16.msra.mxu0 %v1669
  %1758 = vmatpush.bf16.msra.mxu0 %v1668
  %1759 = vmatpush.bf16.msra.mxu0 %v1667
  %1760 = vmatpush.bf16.msra.mxu0 %v1666
  %1761 = vmatpush.bf16.msra.mxu0 %v1665
  %1762 = vmatmul.bf16.gmra.mxu0 %v1417
  %v1763 = vpop.f32.mrf.mxu0
  %v1764 = vadd.f32 %v1731, %v1763
  %v1765 = vpop.f32.mrf.mxu0
  %v1766 = vadd.f32 %v1733, %v1765
  %1767 = vmatmul.bf16.gmra.mxu0 %v1429
  %v1768 = vpop.f32.mrf.mxu0
  %v1769 = vadd.f32 %v1736, %v1768
  %v1770 = vpop.f32.mrf.mxu0
  %v1771 = vadd.f32 %v1738, %v1770
  %1772 = vmatmul.bf16.gmra.mxu0 %v1441
  %v1773 = vpop.f32.mrf.mxu0
  %v1774 = vadd.f32 %v1741, %v1773
  %v1775 = vpop.f32.mrf.mxu0
  %v1776 = vadd.f32 %v1743, %v1775
  %1777 = vmatmul.bf16.gmra.mxu0 %v1453
  %v1778 = vpop.f32.mrf.mxu0
  %v1779 = vadd.f32 %v1746, %v1778
  %v1780 = vpop.f32.mrf.mxu0
  %v1781 = vadd.f32 %v1748, %v1780
  %1782 = vmatmul.bf16.gmra.mxu0 %v1255
  %v1783 = vpop.f32.mrf.mxu0
  %v1784 = vadd.f32 %v1751, %v1783
  %v1785 = vpop.f32.mrf.mxu0
  %1786 = vdwg.mxu0
  %1787 = vmatpush.bf16.msra.mxu0 %v1680
  %1788 = vmatpush.bf16.msra.mxu0 %v1679
  %1789 = vmatpush.bf16.msra.mxu0 %v1678
  %1790 = vmatpush.bf16.msra.mxu0 %v1677
  %1791 = vmatpush.bf16.msra.mxu0 %v1676
  %1792 = vmatpush.bf16.msra.mxu0 %v1675
  %1793 = vmatpush.bf16.msra.mxu0 %v1674
  %1794 = vmatpush.bf16.msra.mxu0 %v1673
  %1795 = vmatmul.bf16.gmra.mxu0 %v1420
  %v1796 = vpop.f32.mrf.mxu0
  %v1797 = vadd.f32 %v1764, %v1796
  %v1798 = vpop.f32.mrf.mxu0
  %v1799 = vadd.f32 %v1766, %v1798
  %1800 = vmatmul.bf16.gmra.mxu0 %v1432
  %v1801 = vpop.f32.mrf.mxu0
  %v1802 = vadd.f32 %v1769, %v1801
  %v1803 = vpop.f32.mrf.mxu0
  %v1804 = vadd.f32 %v1771, %v1803
  %1805 = vmatmul.bf16.gmra.mxu0 %v1444
  %v1806 = vpop.f32.mrf.mxu0
  %v1807 = vadd.f32 %v1774, %v1806
  %v1808 = vpop.f32.mrf.mxu0
  %v1809 = vadd.f32 %v1776, %v1808
  %1810 = vmatmul.bf16.gmra.mxu0 %v1456
  %v1811 = vpop.f32.mrf.mxu0
  %v1812 = vadd.f32 %v1779, %v1811
  %v1813 = vpop.f32.mrf.mxu0
  %v1814 = vadd.f32 %v1781, %v1813
  %1815 = vmatmul.bf16.gmra.mxu0 %v1370
  %v1816 = vpop.f32.mrf.mxu0
  %v1817 = vadd.f32 %v1784, %v1816
  %v1818 = vpop.f32.mrf.mxu0
  %1819 = vdwg.mxu0
  %1820 = vmatpush.bf16.msra.mxu0 %v1688
  %1821 = vmatpush.bf16.msra.mxu0 %v1687
  %1822 = vmatpush.bf16.msra.mxu0 %v1686
  %1823 = vmatpush.bf16.msra.mxu0 %v1685
  %1824 = vmatpush.bf16.msra.mxu0 %v1684
  %1825 = vmatpush.bf16.msra.mxu0 %v1683
  %1826 = vmatpush.bf16.msra.mxu0 %v1682
  %1827 = vmatpush.bf16.msra.mxu0 %v1681
  %1828 = vmatmul.bf16.gmra.mxu0 %v1423
  %v1829 = vpop.f32.mrf.mxu0
  %v1830 = vadd.f32 %v1797, %v1829
  %v1831 = vpop.f32.mrf.mxu0
  %v1832 = vadd.f32 %v1799, %v1831
  %1833 = vmatmul.bf16.gmra.mxu0 %v1435
  %v1834 = vpop.f32.mrf.mxu0
  %v1835 = vadd.f32 %v1802, %v1834
  %v1836 = vpop.f32.mrf.mxu0
  %v1837 = vadd.f32 %v1804, %v1836
  %1838 = vmatmul.bf16.gmra.mxu0 %v1447
  %v1839 = vpop.f32.mrf.mxu0
  %v1840 = vadd.f32 %v1807, %v1839
  %v1841 = vpop.f32.mrf.mxu0
  %v1842 = vadd.f32 %v1809, %v1841
  %1843 = vmatmul.bf16.gmra.mxu0 %v1459
  %v1844 = vpop.f32.mrf.mxu0
  %v1845 = vadd.f32 %v1812, %v1844
  %v1846 = vpop.f32.mrf.mxu0
  %v1847 = vadd.f32 %v1814, %v1846
  %1848 = vmatmul.bf16.gmra.mxu0 %v1378
  %v1849 = vpop.f32.mrf.mxu0
  %v1850 = vadd.f32 %v1817, %v1849
  %v1851 = vpop.f32.mrf.mxu0
  %1852 = vdwg.mxu0
  %v1853 = vmax.f32 %v1830, 0.0
  %v1854 = vmax.f32 %v1832, 0.0
  %v1855 = vmax.f32 %v1835, 0.0
  %v1856 = vmax.f32 %v1837, 0.0
  %v1857 = vmax.f32 %v1840, 0.0
  %v1858 = vmax.f32 %v1842, 0.0
  %v1859 = vmax.f32 %v1845, 0.0
  %v1860 = vmax.f32 %v1847, 0.0
  %v1861 = vmax.f32 %v1850, 0.0
  %v1862 = vpack.c.bf16 %v1853, %v1853
  %v1863 = vpack.c.bf16 %v1854, %v1854
  %v1864 = vpack.c.bf16 %v1855, %v1855
  %v1865 = vpack.c.bf16 %v1856, %v1856
  %v1866 = vpack.c.bf16 %v1857, %v1857
  %v1867 = vpack.c.bf16 %v1858, %v1858
  %v1868 = vpack.c.bf16 %v1859, %v1859
  %v1869 = vpack.c.bf16 %v1860, %v1860
  %v1870 = vpack.c.bf16 %v1861, %v1861
  %v1872 = vunpack.c.l.b16 %v1863
  %v1873 = vpack.c.b16 %v1872, %v1872
  %1874 = vrot.lane.b32.xlu0 %v1873, 64
  %v1875 = vpop.permute.xlu0 %1874
  %v1877 = vunpack.c.l.b16 %v1865
  %v1878 = vpack.c.b16 %v1877, %v1877
  %1879 = vrot.lane.b32.xlu0 %v1878, 64
  %v1880 = vpop.permute.xlu0 %1879
  %v1882 = vunpack.c.l.b16 %v1867
  %v1883 = vpack.c.b16 %v1882, %v1882
  %1884 = vrot.lane.b32.xlu0 %v1883, 64
  %v1885 = vpop.permute.xlu0 %1884
  %v1887 = vunpack.c.l.b16 %v1869
  %v1888 = vpack.c.b16 %v1887, %v1887
  %1889 = vrot.lane.b32.xlu0 %v1888, 64
  %v1890 = vpop.permute.xlu0 %1889
  %v1893 = vsel %vm331, %v1862, %v1875
  %v1897 = vsel %vm331, %v1864, %v1880
  %v1901 = vsel %vm331, %v1866, %v1885
  %v1905 = vsel %vm331, %v1868, %v1890
  %v1907 = vld [vmem:[%s5] sm:$0xf]
  %v1908 = vld [vmem:[%s5 + $0x4] sm:$0xf]
  %v1909 = vld [vmem:[%s5 + $0x8] sm:$0xf]
  %v1910 = vld [vmem:[%s5 + $0xc] sm:$0xf]
  %v1911 = vld [vmem:[%s5 + $0x10] sm:$0xf]
  %v1912 = vld [vmem:[%s5 + $0x14] sm:$0xf]
  %v1913 = vld [vmem:[%s5 + $0x18] sm:$0xf]
  %v1914 = vld [vmem:[%s5 + $0x1c] sm:$0xf]
  %v1915 = vld [vmem:[%s5 + $0x20] sm:$0xf]
  %v1916 = vld [vmem:[%s5 + $0x24] sm:$0xf]
  %v1917 = vld [vmem:[%s5 + $0x28] sm:$0xf]
  %v1918 = vld [vmem:[%s5 + $0x2c] sm:$0xf]
  %v1919 = vld [vmem:[%s5 + $0x30] sm:$0xf]
  %v1920 = vld [vmem:[%s5 + $0x34] sm:$0xf]
  %v1921 = vld [vmem:[%s5 + $0x38] sm:$0xf]
  %v1922 = vld [vmem:[%s5 + $0x3c] sm:$0xf]
  %v1923 = vld [vmem:[%s5 + $0x40] sm:$0xf]
  %v1924 = vld [vmem:[%s5 + $0x44] sm:$0xf]
  %v1925 = vld [vmem:[%s5 + $0x48] sm:$0xf]
  %v1926 = vld [vmem:[%s5 + $0x4c] sm:$0xf]
  %v1927 = vld [vmem:[%s5 + $0x50] sm:$0xf]
  %v1928 = vld [vmem:[%s5 + $0x54] sm:$0xf]
  %v1929 = vld [vmem:[%s5 + $0x58] sm:$0xf]
  %v1930 = vld [vmem:[%s5 + $0x5c] sm:$0xf]
  %v1931 = vld [vmem:[%s5 + $0x60] sm:$0xf]
  %v1932 = vld [vmem:[%s5 + $0x64] sm:$0xf]
  %v1933 = vld [vmem:[%s5 + $0x68] sm:$0xf]
  %v1934 = vld [vmem:[%s5 + $0x6c] sm:$0xf]
  %v1935 = vld [vmem:[%s5 + $0x70] sm:$0xf]
  %v1936 = vld [vmem:[%s5 + $0x74] sm:$0xf]
  %v1937 = vld [vmem:[%s5 + $0x78] sm:$0xf]
  %v1938 = vld [vmem:[%s5 + $0x7c] sm:$0xf]
  %v1939 = vld [vmem:[%s5 + $0x80] sm:$0xf]
  %v1940 = vld [vmem:[%s5 + $0x84] sm:$0xf]
  %v1941 = vld [vmem:[%s5 + $0x88] sm:$0xf]
  %v1942 = vld [vmem:[%s5 + $0x8c] sm:$0xf]
  %v1943 = vld [vmem:[%s5 + $0x90] sm:$0xf]
  %v1944 = vld [vmem:[%s5 + $0x94] sm:$0xf]
  %v1945 = vld [vmem:[%s5 + $0x98] sm:$0xf]
  %v1946 = vld [vmem:[%s5 + $0x9c] sm:$0xf]
  %v1947 = vld [vmem:[%s5 + $0xa0] sm:$0xf]
  %v1948 = vld [vmem:[%s5 + $0xa4] sm:$0xf]
  %v1949 = vld [vmem:[%s5 + $0xa8] sm:$0xf]
  %v1950 = vld [vmem:[%s5 + $0xac] sm:$0xf]
  %v1951 = vld [vmem:[%s5 + $0xb0] sm:$0xf]
  %v1952 = vld [vmem:[%s5 + $0xb4] sm:$0xf]
  %v1953 = vld [vmem:[%s5 + $0xb8] sm:$0xf]
  %v1954 = vld [vmem:[%s5 + $0xbc] sm:$0xf]
  %v1955 = vld [vmem:[%s5 + $0xc0] sm:$0xf]
  %v1956 = vld [vmem:[%s5 + $0xc4] sm:$0xf]
  %v1957 = vld [vmem:[%s5 + $0xc8] sm:$0xf]
  %v1958 = vld [vmem:[%s5 + $0xcc] sm:$0xf]
  %v1959 = vld [vmem:[%s5 + $0xd0] sm:$0xf]
  %v1960 = vld [vmem:[%s5 + $0xd4] sm:$0xf]
  %v1961 = vld [vmem:[%s5 + $0xd8] sm:$0xf]
  %v1962 = vld [vmem:[%s5 + $0xdc] sm:$0xf]
  %v1963 = vld [vmem:[%s5 + $0xe0] sm:$0xf]
  %v1964 = vld [vmem:[%s5 + $0xe4] sm:$0xf]
  %v1965 = vld [vmem:[%s5 + $0xe8] sm:$0xf]
  %v1966 = vld [vmem:[%s5 + $0xec] sm:$0xf]
  %v1967 = vld [vmem:[%s5 + $0xf0] sm:$0xf]
  %v1968 = vld [vmem:[%s5 + $0xf4] sm:$0xf]
  %v1969 = vld [vmem:[%s5 + $0xf8] sm:$0xf]
  %v1970 = vld [vmem:[%s5 + $0xfc] sm:$0xf]
  %v1971 = vld [vmem:[%s5 + $0x100] sm:$0xf]
  %v1972 = vld [vmem:[%s5 + $0x104] sm:$0xf]
  %v1973 = vld [vmem:[%s5 + $0x108] sm:$0xf]
  %v1974 = vld [vmem:[%s5 + $0x10c] sm:$0xf]
  %v1975 = vld [vmem:[%s5 + $0x110] sm:$0xf]
  %v1976 = vld [vmem:[%s5 + $0x114] sm:$0xf]
  %v1977 = vld [vmem:[%s5 + $0x118] sm:$0xf]
  %v1978 = vld [vmem:[%s5 + $0x11c] sm:$0xf]
  %v1979 = vld [vmem:[%s6] sm:$0x1]
  %v1981 = vperm.slane %v1979, 0
  %v2055 = vunpack.c.l.b16 %v1907
  %v2056 = vunpack.c.l.b16 %v1908
  %v2057 = vunpack.c.l.b16 %v1909
  %v2058 = vunpack.c.l.b16 %v1910
  %v2059 = vunpack.c.l.b16 %v1911
  %v2060 = vunpack.c.l.b16 %v1912
  %v2061 = vunpack.c.l.b16 %v1913
  %v2062 = vunpack.c.l.b16 %v1914
  %v2063 = vunpack.c.l.b16 %v1915
  %v2064 = vunpack.c.l.b16 %v1916
  %v2065 = vunpack.c.l.b16 %v1917
  %v2066 = vunpack.c.l.b16 %v1918
  %v2067 = vunpack.c.l.b16 %v1919
  %v2068 = vunpack.c.l.b16 %v1920
  %v2069 = vunpack.c.l.b16 %v1921
  %v2070 = vunpack.c.l.b16 %v1922
  %v2071 = vunpack.c.l.b16 %v1923
  %v2072 = vunpack.c.l.b16 %v1924
  %v2073 = vunpack.c.l.b16 %v1925
  %v2074 = vunpack.c.l.b16 %v1926
  %v2075 = vunpack.c.l.b16 %v1927
  %v2076 = vunpack.c.l.b16 %v1928
  %v2077 = vunpack.c.l.b16 %v1929
  %v2078 = vunpack.c.l.b16 %v1930
  %v2079 = vunpack.c.l.b16 %v1931
  %v2080 = vunpack.c.l.b16 %v1932
  %v2081 = vunpack.c.l.b16 %v1933
  %v2082 = vunpack.c.l.b16 %v1934
  %v2083 = vunpack.c.l.b16 %v1935
  %v2084 = vunpack.c.l.b16 %v1936
  %v2085 = vunpack.c.l.b16 %v1937
  %v2086 = vunpack.c.l.b16 %v1938
  %v2087 = vunpack.c.l.b16 %v1939
  %v2088 = vunpack.c.l.b16 %v1940
  %v2089 = vunpack.c.l.b16 %v1941
  %v2090 = vunpack.c.l.b16 %v1942
  %v2091 = vunpack.c.l.b16 %v1943
  %v2092 = vunpack.c.l.b16 %v1944
  %v2093 = vunpack.c.l.b16 %v1945
  %v2094 = vunpack.c.l.b16 %v1946
  %v2095 = vunpack.c.l.b16 %v1947
  %v2096 = vunpack.c.l.b16 %v1948
  %v2097 = vunpack.c.l.b16 %v1949
  %v2098 = vunpack.c.l.b16 %v1950
  %v2099 = vunpack.c.l.b16 %v1951
  %v2100 = vunpack.c.l.b16 %v1952
  %v2101 = vunpack.c.l.b16 %v1953
  %v2102 = vunpack.c.l.b16 %v1954
  %v2103 = vunpack.c.l.b16 %v1955
  %v2104 = vunpack.c.l.b16 %v1956
  %v2105 = vunpack.c.l.b16 %v1957
  %v2106 = vunpack.c.l.b16 %v1958
  %v2107 = vunpack.c.l.b16 %v1959
  %v2108 = vunpack.c.l.b16 %v1960
  %v2109 = vunpack.c.l.b16 %v1961
  %v2110 = vunpack.c.l.b16 %v1962
  %v2111 = vunpack.c.l.b16 %v1963
  %v2112 = vunpack.c.l.b16 %v1964
  %v2113 = vunpack.c.l.b16 %v1965
  %v2114 = vunpack.c.l.b16 %v1966
  %v2115 = vunpack.c.l.b16 %v1967
  %v2116 = vunpack.c.l.b16 %v1968
  %v2117 = vunpack.c.l.b16 %v1969
  %v2118 = vunpack.c.l.b16 %v1970
  %v2119 = vunpack.c.l.b16 %v1971
  %v2120 = vunpack.c.l.b16 %v1972
  %v2121 = vunpack.c.l.b16 %v1973
  %v2122 = vunpack.c.l.b16 %v1974
  %v2123 = vunpack.c.l.b16 %v1975
  %v2124 = vunpack.c.l.b16 %v1976
  %v2125 = vunpack.c.l.b16 %v1977
  %v2126 = vunpack.c.l.b16 %v1978
  %v2127 = vpack.c.b16 %v2056, %v2055
  %v2128 = vpack.c.b16 %v2058, %v2057
  %v2129 = vpack.c.b16 %v2060, %v2059
  %v2130 = vpack.c.b16 %v2062, %v2061
  %v2131 = vpack.c.b16 %v2064, %v2063
  %v2132 = vpack.c.b16 %v2066, %v2065
  %v2133 = vpack.c.b16 %v2068, %v2067
  %v2134 = vpack.c.b16 %v2070, %v2069
  %v2135 = vpack.c.b16 %v2072, %v2071
  %v2136 = vpack.c.b16 %v2074, %v2073
  %v2137 = vpack.c.b16 %v2076, %v2075
  %v2138 = vpack.c.b16 %v2078, %v2077
  %v2139 = vpack.c.b16 %v2080, %v2079
  %v2140 = vpack.c.b16 %v2082, %v2081
  %v2141 = vpack.c.b16 %v2084, %v2083
  %v2142 = vpack.c.b16 %v2086, %v2085
  %v2143 = vpack.c.b16 %v2088, %v2087
  %v2144 = vpack.c.b16 %v2090, %v2089
  %v2145 = vpack.c.b16 %v2092, %v2091
  %v2146 = vpack.c.b16 %v2094, %v2093
  %v2147 = vpack.c.b16 %v2096, %v2095
  %v2148 = vpack.c.b16 %v2098, %v2097
  %v2149 = vpack.c.b16 %v2100, %v2099
  %v2150 = vpack.c.b16 %v2102, %v2101
  %v2151 = vpack.c.b16 %v2104, %v2103
  %v2152 = vpack.c.b16 %v2106, %v2105
  %v2153 = vpack.c.b16 %v2108, %v2107
  %v2154 = vpack.c.b16 %v2110, %v2109
  %v2155 = vpack.c.b16 %v2112, %v2111
  %v2156 = vpack.c.b16 %v2114, %v2113
  %v2157 = vpack.c.b16 %v2116, %v2115
  %v2158 = vpack.c.b16 %v2118, %v2117
  %v2159 = vpack.c.b16 %v2120, %v2119
  %v2160 = vpack.c.b16 %v2122, %v2121
  %v2161 = vpack.c.b16 %v2124, %v2123
  %v2162 = vpack.c.b16 %v2126, %v2125
  %v2200 = vsel %vm331, %v1870, 0
  %2202 = vmatpush.bf16.msra.mxu0 %v2134
  %2203 = vmatpush.bf16.msra.mxu0 %v2133
  %2204 = vmatpush.bf16.msra.mxu0 %v2132
  %2205 = vmatpush.bf16.msra.mxu0 %v2131
  %2206 = vmatpush.bf16.msra.mxu0 %v2130
  %2207 = vmatpush.bf16.msra.mxu0 %v2129
  %2208 = vmatpush.bf16.msra.mxu0 %v2128
  %2209 = vmatpush.bf16.msra.mxu0 %v2127
  %2210 = vmatmul.bf16.gmra.mxu0 %v1893
  %v2211 = vpop.f32.mrf.mxu0
  %v2212 = vadd.f32 %v1981, %v2211
  %v2213 = vpop.f32.mrf.mxu0
  %2214 = vdwg.mxu0
  %2215 = vmatpush.bf16.msra.mxu0 %v2142
  %2216 = vmatpush.bf16.msra.mxu0 %v2141
  %2217 = vmatpush.bf16.msra.mxu0 %v2140
  %2218 = vmatpush.bf16.msra.mxu0 %v2139
  %2219 = vmatpush.bf16.msra.mxu0 %v2138
  %2220 = vmatpush.bf16.msra.mxu0 %v2137
  %2221 = vmatpush.bf16.msra.mxu0 %v2136
  %2222 = vmatpush.bf16.msra.mxu0 %v2135
  %2223 = vmatmul.bf16.gmra.mxu0 %v1897
  %v2224 = vpop.f32.mrf.mxu0
  %v2225 = vadd.f32 %v2212, %v2224
  %v2226 = vpop.f32.mrf.mxu0
  %2227 = vdwg.mxu0
  %2228 = vmatpush.bf16.msra.mxu0 %v2150
  %2229 = vmatpush.bf16.msra.mxu0 %v2149
  %2230 = vmatpush.bf16.msra.mxu0 %v2148
  %2231 = vmatpush.bf16.msra.mxu0 %v2147
  %2232 = vmatpush.bf16.msra.mxu0 %v2146
  %2233 = vmatpush.bf16.msra.mxu0 %v2145
  %2234 = vmatpush.bf16.msra.mxu0 %v2144
  %2235 = vmatpush.bf16.msra.mxu0 %v2143
  %2236 = vmatmul.bf16.gmra.mxu0 %v1901
  %v2237 = vpop.f32.mrf.mxu0
  %v2238 = vadd.f32 %v2225, %v2237
  %v2239 = vpop.f32.mrf.mxu0
  %2240 = vdwg.mxu0
  %2241 = vmatpush.bf16.msra.mxu0 %v2158
  %2242 = vmatpush.bf16.msra.mxu0 %v2157
  %2243 = vmatpush.bf16.msra.mxu0 %v2156
  %2244 = vmatpush.bf16.msra.mxu0 %v2155
  %2245 = vmatpush.bf16.msra.mxu0 %v2154
  %2246 = vmatpush.bf16.msra.mxu0 %v2153
  %2247 = vmatpush.bf16.msra.mxu0 %v2152
  %2248 = vmatpush.bf16.msra.mxu0 %v2151
  %2249 = vmatmul.bf16.gmra.mxu0 %v1905
  %v2250 = vpop.f32.mrf.mxu0
  %v2251 = vadd.f32 %v2238, %v2250
  %v2252 = vpop.f32.mrf.mxu0
  %2253 = vdwg.mxu0
  %2254 = vmatpush.bf16.msra.mxu0 0
  %2255 = vmatpush.bf16.msra.mxu0 0
  %2256 = vmatpush.bf16.msra.mxu0 0
  %2257 = vmatpush.bf16.msra.mxu0 0
  %2258 = vmatpush.bf16.msra.mxu0 %v2162
  %2259 = vmatpush.bf16.msra.mxu0 %v2161
  %2260 = vmatpush.bf16.msra.mxu0 %v2160
  %2261 = vmatpush.bf16.msra.mxu0 %v2159
  %2262 = vmatmul.bf16.gmra.mxu0 %v2200
  %v2263 = vpop.f32.mrf.mxu0
  %v2264 = vadd.f32 %v2251, %v2263
  %v2265 = vpop.f32.mrf.mxu0
  %2266 = vdwg.mxu0
  %v2267 = vmax.f32 %v2264, 0.0
  %v2268 = vpack.c.bf16 %v2267, %v2267
  %v2269 = vld [vmem:[%s7] sm:$0xff]
  %v2270 = vld [vmem:[%s7 + $0x8] sm:$0xff]
  %v2271 = vld [vmem:[%s7 + $0x10] sm:$0xff]
  %v2272 = vld [vmem:[%s7 + $0x18] sm:$0xff]
  %v2273 = vld [vmem:[%s7 + $0x20] sm:$0xff]
  %v2274 = vld [vmem:[%s7 + $0x28] sm:$0xff]
  %v2275 = vld [vmem:[%s7 + $0x30] sm:$0xff]
  %v2276 = vld [vmem:[%s7 + $0x38] sm:$0xff]
  %v2277 = vld [vmem:[%s7 + $0x40] sm:$0xff]
  %v2278 = vld [vmem:[%s7 + $0x48] sm:$0xff]
  %v2279 = vld [vmem:[%s7 + $0x50] sm:$0xff]
  %v2280 = vld [vmem:[%s7 + $0x58] sm:$0xff]
  %v2281 = vld [vmem:[%s7 + $0x60] sm:$0xff]
  %v2282 = vld [vmem:[%s7 + $0x68] sm:$0xff]
  %v2283 = vld [vmem:[%s7 + $0x70] sm:$0xff]
  %v2284 = vld [vmem:[%s7 + $0x78] sm:$0xff]
  %v2285 = vld [vmem:[%s8] sm:$0xf]
  %v2287 = vperm.slane %v2285, 0
  %v2288 = vperm.slane %v2285, 1
  %v2289 = vperm.slane %v2285, 2
  %v2290 = vperm.slane %v2285, 3
  %v2311 = vunpack.c.l.b16 %v2269
  %v2312 = vunpack.c.h.b16 %v2269
  %v2313 = vunpack.c.l.b16 %v2270
  %v2314 = vunpack.c.h.b16 %v2270
  %v2315 = vunpack.c.l.b16 %v2271
  %v2316 = vunpack.c.h.b16 %v2271
  %v2317 = vunpack.c.l.b16 %v2272
  %v2318 = vunpack.c.h.b16 %v2272
  %v2319 = vunpack.c.l.b16 %v2273
  %v2320 = vunpack.c.h.b16 %v2273
  %v2321 = vunpack.c.l.b16 %v2274
  %v2322 = vunpack.c.h.b16 %v2274
  %v2323 = vunpack.c.l.b16 %v2275
  %v2324 = vunpack.c.h.b16 %v2275
  %v2325 = vunpack.c.l.b16 %v2276
  %v2326 = vunpack.c.h.b16 %v2276
  %v2327 = vunpack.c.l.b16 %v2277
  %v2328 = vunpack.c.h.b16 %v2277
  %v2329 = vunpack.c.l.b16 %v2278
  %v2330 = vunpack.c.h.b16 %v2278
  %v2331 = vunpack.c.l.b16 %v2279
  %v2332 = vunpack.c.h.b16 %v2279
  %v2333 = vunpack.c.l.b16 %v2280
  %v2334 = vunpack.c.h.b16 %v2280
  %v2335 = vunpack.c.l.b16 %v2281
  %v2336 = vunpack.c.h.b16 %v2281
  %v2337 = vunpack.c.l.b16 %v2282
  %v2338 = vunpack.c.h.b16 %v2282
  %v2339 = vunpack.c.l.b16 %v2283
  %v2340 = vunpack.c.h.b16 %v2283
  %v2341 = vunpack.c.l.b16 %v2284
  %v2342 = vunpack.c.h.b16 %v2284
  %v2343 = vpack.c.b16 %v2315, %v2311
  %v2344 = vpack.c.b16 %v2316, %v2312
  %v2345 = vpack.c.b16 %v2317, %v2313
  %v2346 = vpack.c.b16 %v2318, %v2314
  %v2347 = vpack.c.b16 %v2323, %v2319
  %v2348 = vpack.c.b16 %v2324, %v2320
  %v2349 = vpack.c.b16 %v2325, %v2321
  %v2350 = vpack.c.b16 %v2326, %v2322
  %v2351 = vpack.c.b16 %v2331, %v2327
  %v2352 = vpack.c.b16 %v2332, %v2328
  %v2353 = vpack.c.b16 %v2333, %v2329
  %v2354 = vpack.c.b16 %v2334, %v2330
  %v2355 = vpack.c.b16 %v2339, %v2335
  %v2356 = vpack.c.b16 %v2340, %v2336
  %v2357 = vpack.c.b16 %v2341, %v2337
  %v2358 = vpack.c.b16 %v2342, %v2338
  %v2376 = vsel %vm331, %v2268, 0
  %2378 = vmatpush.bf16.msra.mxu0 0
  %2379 = vmatpush.bf16.msra.mxu0 0
  %2380 = vmatpush.bf16.msra.mxu0 0
  %2381 = vmatpush.bf16.msra.mxu0 0
  %2382 = vmatpush.bf16.msra.mxu0 %v2355
  %2383 = vmatpush.bf16.msra.mxu0 %v2351
  %2384 = vmatpush.bf16.msra.mxu0 %v2347
  %2385 = vmatpush.bf16.msra.mxu0 %v2343
  %2386 = vmatmul.bf16.gmra.mxu0 %v2376
  %v2387 = vpop.f32.mrf.mxu0
  %v2388 = vadd.f32 %v2287, %v2387
  %v2389 = vpop.f32.mrf.mxu0
  %2390 = vdwg.mxu0
  %2391 = vmatpush.bf16.msra.mxu0 0
  %2392 = vmatpush.bf16.msra.mxu0 0
  %2393 = vmatpush.bf16.msra.mxu0 0
  %2394 = vmatpush.bf16.msra.mxu0 0
  %2395 = vmatpush.bf16.msra.mxu0 %v2356
  %2396 = vmatpush.bf16.msra.mxu0 %v2352
  %2397 = vmatpush.bf16.msra.mxu0 %v2348
  %2398 = vmatpush.bf16.msra.mxu0 %v2344
  %2399 = vmatmul.bf16.gmra.mxu0 %v2376
  %v2400 = vpop.f32.mrf.mxu0
  %v2401 = vadd.f32 %v2288, %v2400
  %v2402 = vpop.f32.mrf.mxu0
  %2403 = vdwg.mxu0
  %2404 = vmatpush.bf16.msra.mxu0 0
  %2405 = vmatpush.bf16.msra.mxu0 0
  %2406 = vmatpush.bf16.msra.mxu0 0
  %2407 = vmatpush.bf16.msra.mxu0 0
  %2408 = vmatpush.bf16.msra.mxu0 %v2357
  %2409 = vmatpush.bf16.msra.mxu0 %v2353
  %2410 = vmatpush.bf16.msra.mxu0 %v2349
  %2411 = vmatpush.bf16.msra.mxu0 %v2345
  %2412 = vmatmul.bf16.gmra.mxu0 %v2376
  %v2413 = vpop.f32.mrf.mxu0
  %v2414 = vadd.f32 %v2289, %v2413
  %v2415 = vpop.f32.mrf.mxu0
  %2416 = vdwg.mxu0
  %2417 = vmatpush.bf16.msra.mxu0 0
  %2418 = vmatpush.bf16.msra.mxu0 0
  %2419 = vmatpush.bf16.msra.mxu0 0
  %2420 = vmatpush.bf16.msra.mxu0 0
  %2421 = vmatpush.bf16.msra.mxu0 %v2358
  %2422 = vmatpush.bf16.msra.mxu0 %v2354
  %2423 = vmatpush.bf16.msra.mxu0 %v2350
  %2424 = vmatpush.bf16.msra.mxu0 %v2346
  %2425 = vmatmul.bf16.gmra.mxu0 %v2376
  %v2426 = vpop.f32.mrf.mxu0
  %v2427 = vadd.f32 %v2290, %v2426
  %v2428 = vpop.f32.mrf.mxu0
  %2429 = vdwg.mxu0
  %v2430 = vmax.f32 %v2388, 0.0
  %v2431 = vmax.f32 %v2401, 0.0
  %v2432 = vmax.f32 %v2414, 0.0
  %v2433 = vmax.f32 %v2427, 0.0
  %v2434 = vpack.c.bf16 %v2430, %v2430
  %v2435 = vpack.c.bf16 %v2431, %v2431
  %v2436 = vpack.c.bf16 %v2432, %v2432
  %v2437 = vpack.c.bf16 %v2433, %v2433
  %v2438 = vld [vmem:[%s9] sm:$0xf]
  %v2439 = vld [vmem:[%s9 + $0x4] sm:$0xf]
  %v2440 = vld [vmem:[%s9 + $0x8] sm:$0xf]
  %v2441 = vld [vmem:[%s9 + $0xc] sm:$0xf]
  %v2442 = vld [vmem:[%s9 + $0x10] sm:$0xf]
  %v2443 = vld [vmem:[%s9 + $0x14] sm:$0xf]
  %v2444 = vld [vmem:[%s9 + $0x18] sm:$0xf]
  %v2445 = vld [vmem:[%s9 + $0x1c] sm:$0xf]
  %v2446 = vld [vmem:[%s9 + $0x20] sm:$0xf]
  %v2447 = vld [vmem:[%s9 + $0x24] sm:$0xf]
  %v2448 = vld [vmem:[%s9 + $0x28] sm:$0xf]
  %v2449 = vld [vmem:[%s9 + $0x2c] sm:$0xf]
  %v2450 = vld [vmem:[%s9 + $0x30] sm:$0xf]
  %v2451 = vld [vmem:[%s9 + $0x34] sm:$0xf]
  %v2452 = vld [vmem:[%s9 + $0x38] sm:$0xf]
  %v2453 = vld [vmem:[%s9 + $0x3c] sm:$0xf]
  %v2454 = vld [vmem:[%s9 + $0x40] sm:$0xf]
  %v2455 = vld [vmem:[%s9 + $0x44] sm:$0xf]
  %v2456 = vld [vmem:[%s9 + $0x48] sm:$0xf]
  %v2457 = vld [vmem:[%s9 + $0x4c] sm:$0xf]
  %v2458 = vld [vmem:[%s9 + $0x50] sm:$0xf]
  %v2459 = vld [vmem:[%s9 + $0x54] sm:$0xf]
  %v2460 = vld [vmem:[%s9 + $0x58] sm:$0xf]
  %v2461 = vld [vmem:[%s9 + $0x5c] sm:$0xf]
  %v2462 = vld [vmem:[%s9 + $0x60] sm:$0xf]
  %v2463 = vld [vmem:[%s9 + $0x64] sm:$0xf]
  %v2464 = vld [vmem:[%s9 + $0x68] sm:$0xf]
  %v2465 = vld [vmem:[%s9 + $0x6c] sm:$0xf]
  %v2466 = vld [vmem:[%s9 + $0x70] sm:$0xf]
  %v2467 = vld [vmem:[%s9 + $0x74] sm:$0xf]
  %v2468 = vld [vmem:[%s9 + $0x78] sm:$0xf]
  %v2469 = vld [vmem:[%s9 + $0x7c] sm:$0xf]
  %v2470 = vld [vmem:[%s9 + $0x80] sm:$0xf]
  %v2471 = vld [vmem:[%s9 + $0x84] sm:$0xf]
  %v2472 = vld [vmem:[%s9 + $0x88] sm:$0xf]
  %v2473 = vld [vmem:[%s9 + $0x8c] sm:$0xf]
  %v2474 = vld [vmem:[%s9 + $0x90] sm:$0xf]
  %v2475 = vld [vmem:[%s9 + $0x94] sm:$0xf]
  %v2476 = vld [vmem:[%s9 + $0x98] sm:$0xf]
  %v2477 = vld [vmem:[%s9 + $0x9c] sm:$0xf]
  %v2478 = vld [vmem:[%s9 + $0xa0] sm:$0xf]
  %v2479 = vld [vmem:[%s9 + $0xa4] sm:$0xf]
  %v2480 = vld [vmem:[%s9 + $0xa8] sm:$0xf]
  %v2481 = vld [vmem:[%s9 + $0xac] sm:$0xf]
  %v2482 = vld [vmem:[%s9 + $0xb0] sm:$0xf]
  %v2483 = vld [vmem:[%s9 + $0xb4] sm:$0xf]
  %v2484 = vld [vmem:[%s9 + $0xb8] sm:$0xf]
  %v2485 = vld [vmem:[%s9 + $0xbc] sm:$0xf]
  %v2486 = vld [vmem:[%s9 + $0xc0] sm:$0xf]
  %v2487 = vld [vmem:[%s9 + $0xc4] sm:$0xf]
  %v2488 = vld [vmem:[%s9 + $0xc8] sm:$0xf]
  %v2489 = vld [vmem:[%s9 + $0xcc] sm:$0xf]
  %v2490 = vld [vmem:[%s9 + $0xd0] sm:$0xf]
  %v2491 = vld [vmem:[%s9 + $0xd4] sm:$0xf]
  %v2492 = vld [vmem:[%s9 + $0xd8] sm:$0xf]
  %v2493 = vld [vmem:[%s9 + $0xdc] sm:$0xf]
  %v2494 = vld [vmem:[%s9 + $0xe0] sm:$0xf]
  %v2495 = vld [vmem:[%s9 + $0xe4] sm:$0xf]
  %v2496 = vld [vmem:[%s9 + $0xe8] sm:$0xf]
  %v2497 = vld [vmem:[%s9 + $0xec] sm:$0xf]
  %v2498 = vld [vmem:[%s9 + $0xf0] sm:$0xf]
  %v2499 = vld [vmem:[%s9 + $0xf4] sm:$0xf]
  %v2500 = vld [vmem:[%s9 + $0xf8] sm:$0xf]
  %v2501 = vld [vmem:[%s9 + $0xfc] sm:$0xf]
  %v2502 = vld [vmem:[%s10] sm:$0x1]
  %v2504 = vperm.slane %v2502, 0
  %v2570 = vunpack.c.l.b16 %v2438
  %v2571 = vunpack.c.l.b16 %v2439
  %v2572 = vunpack.c.l.b16 %v2440
  %v2573 = vunpack.c.l.b16 %v2441
  %v2574 = vunpack.c.l.b16 %v2442
  %v2575 = vunpack.c.l.b16 %v2443
  %v2576 = vunpack.c.l.b16 %v2444
  %v2577 = vunpack.c.l.b16 %v2445
  %v2578 = vunpack.c.l.b16 %v2446
  %v2579 = vunpack.c.l.b16 %v2447
  %v2580 = vunpack.c.l.b16 %v2448
  %v2581 = vunpack.c.l.b16 %v2449
  %v2582 = vunpack.c.l.b16 %v2450
  %v2583 = vunpack.c.l.b16 %v2451
  %v2584 = vunpack.c.l.b16 %v2452
  %v2585 = vunpack.c.l.b16 %v2453
  %v2586 = vunpack.c.l.b16 %v2454
  %v2587 = vunpack.c.l.b16 %v2455
  %v2588 = vunpack.c.l.b16 %v2456
  %v2589 = vunpack.c.l.b16 %v2457
  %v2590 = vunpack.c.l.b16 %v2458
  %v2591 = vunpack.c.l.b16 %v2459
  %v2592 = vunpack.c.l.b16 %v2460
  %v2593 = vunpack.c.l.b16 %v2461
  %v2594 = vunpack.c.l.b16 %v2462
  %v2595 = vunpack.c.l.b16 %v2463
  %v2596 = vunpack.c.l.b16 %v2464
  %v2597 = vunpack.c.l.b16 %v2465
  %v2598 = vunpack.c.l.b16 %v2466
  %v2599 = vunpack.c.l.b16 %v2467
  %v2600 = vunpack.c.l.b16 %v2468
  %v2601 = vunpack.c.l.b16 %v2469
  %v2602 = vunpack.c.l.b16 %v2470
  %v2603 = vunpack.c.l.b16 %v2471
  %v2604 = vunpack.c.l.b16 %v2472
  %v2605 = vunpack.c.l.b16 %v2473
  %v2606 = vunpack.c.l.b16 %v2474
  %v2607 = vunpack.c.l.b16 %v2475
  %v2608 = vunpack.c.l.b16 %v2476
  %v2609 = vunpack.c.l.b16 %v2477
  %v2610 = vunpack.c.l.b16 %v2478
  %v2611 = vunpack.c.l.b16 %v2479
  %v2612 = vunpack.c.l.b16 %v2480
  %v2613 = vunpack.c.l.b16 %v2481
  %v2614 = vunpack.c.l.b16 %v2482
  %v2615 = vunpack.c.l.b16 %v2483
  %v2616 = vunpack.c.l.b16 %v2484
  %v2617 = vunpack.c.l.b16 %v2485
  %v2618 = vunpack.c.l.b16 %v2486
  %v2619 = vunpack.c.l.b16 %v2487
  %v2620 = vunpack.c.l.b16 %v2488
  %v2621 = vunpack.c.l.b16 %v2489
  %v2622 = vunpack.c.l.b16 %v2490
  %v2623 = vunpack.c.l.b16 %v2491
  %v2624 = vunpack.c.l.b16 %v2492
  %v2625 = vunpack.c.l.b16 %v2493
  %v2626 = vunpack.c.l.b16 %v2494
  %v2627 = vunpack.c.l.b16 %v2495
  %v2628 = vunpack.c.l.b16 %v2496
  %v2629 = vunpack.c.l.b16 %v2497
  %v2630 = vunpack.c.l.b16 %v2498
  %v2631 = vunpack.c.l.b16 %v2499
  %v2632 = vunpack.c.l.b16 %v2500
  %v2633 = vunpack.c.l.b16 %v2501
  %v2634 = vpack.c.b16 %v2571, %v2570
  %v2635 = vpack.c.b16 %v2573, %v2572
  %v2636 = vpack.c.b16 %v2575, %v2574
  %v2637 = vpack.c.b16 %v2577, %v2576
  %v2638 = vpack.c.b16 %v2579, %v2578
  %v2639 = vpack.c.b16 %v2581, %v2580
  %v2640 = vpack.c.b16 %v2583, %v2582
  %v2641 = vpack.c.b16 %v2585, %v2584
  %v2642 = vpack.c.b16 %v2587, %v2586
  %v2643 = vpack.c.b16 %v2589, %v2588
  %v2644 = vpack.c.b16 %v2591, %v2590
  %v2645 = vpack.c.b16 %v2593, %v2592
  %v2646 = vpack.c.b16 %v2595, %v2594
  %v2647 = vpack.c.b16 %v2597, %v2596
  %v2648 = vpack.c.b16 %v2599, %v2598
  %v2649 = vpack.c.b16 %v2601, %v2600
  %v2650 = vpack.c.b16 %v2603, %v2602
  %v2651 = vpack.c.b16 %v2605, %v2604
  %v2652 = vpack.c.b16 %v2607, %v2606
  %v2653 = vpack.c.b16 %v2609, %v2608
  %v2654 = vpack.c.b16 %v2611, %v2610
  %v2655 = vpack.c.b16 %v2613, %v2612
  %v2656 = vpack.c.b16 %v2615, %v2614
  %v2657 = vpack.c.b16 %v2617, %v2616
  %v2658 = vpack.c.b16 %v2619, %v2618
  %v2659 = vpack.c.b16 %v2621, %v2620
  %v2660 = vpack.c.b16 %v2623, %v2622
  %v2661 = vpack.c.b16 %v2625, %v2624
  %v2662 = vpack.c.b16 %v2627, %v2626
  %v2663 = vpack.c.b16 %v2629, %v2628
  %v2664 = vpack.c.b16 %v2631, %v2630
  %v2665 = vpack.c.b16 %v2633, %v2632
  %2698 = vmatpush.bf16.msra.mxu0 %v2641
  %2699 = vmatpush.bf16.msra.mxu0 %v2640
  %2700 = vmatpush.bf16.msra.mxu0 %v2639
  %2701 = vmatpush.bf16.msra.mxu0 %v2638
  %2702 = vmatpush.bf16.msra.mxu0 %v2637
  %2703 = vmatpush.bf16.msra.mxu0 %v2636
  %2704 = vmatpush.bf16.msra.mxu0 %v2635
  %2705 = vmatpush.bf16.msra.mxu0 %v2634
  %2706 = vmatmul.bf16.gmra.mxu0 %v2434
  %v2707 = vpop.f32.mrf.mxu0
  %v2708 = vadd.f32 %v2504, %v2707
  %v2709 = vpop.f32.mrf.mxu0
  %2710 = vdwg.mxu0
  %2711 = vmatpush.bf16.msra.mxu0 %v2649
  %2712 = vmatpush.bf16.msra.mxu0 %v2648
  %2713 = vmatpush.bf16.msra.mxu0 %v2647
  %2714 = vmatpush.bf16.msra.mxu0 %v2646
  %2715 = vmatpush.bf16.msra.mxu0 %v2645
  %2716 = vmatpush.bf16.msra.mxu0 %v2644
  %2717 = vmatpush.bf16.msra.mxu0 %v2643
  %2718 = vmatpush.bf16.msra.mxu0 %v2642
  %2719 = vmatmul.bf16.gmra.mxu0 %v2435
  %v2720 = vpop.f32.mrf.mxu0
  %v2721 = vadd.f32 %v2708, %v2720
  %v2722 = vpop.f32.mrf.mxu0
  %2723 = vdwg.mxu0
  %2724 = vmatpush.bf16.msra.mxu0 %v2657
  %2725 = vmatpush.bf16.msra.mxu0 %v2656
  %2726 = vmatpush.bf16.msra.mxu0 %v2655
  %2727 = vmatpush.bf16.msra.mxu0 %v2654
  %2728 = vmatpush.bf16.msra.mxu0 %v2653
  %2729 = vmatpush.bf16.msra.mxu0 %v2652
  %2730 = vmatpush.bf16.msra.mxu0 %v2651
  %2731 = vmatpush.bf16.msra.mxu0 %v2650
  %2732 = vmatmul.bf16.gmra.mxu0 %v2436
  %v2733 = vpop.f32.mrf.mxu0
  %v2734 = vadd.f32 %v2721, %v2733
  %v2735 = vpop.f32.mrf.mxu0
  %2736 = vdwg.mxu0
  %2737 = vmatpush.bf16.msra.mxu0 %v2665
  %2738 = vmatpush.bf16.msra.mxu0 %v2664
  %2739 = vmatpush.bf16.msra.mxu0 %v2663
  %2740 = vmatpush.bf16.msra.mxu0 %v2662
  %2741 = vmatpush.bf16.msra.mxu0 %v2661
  %2742 = vmatpush.bf16.msra.mxu0 %v2660
  %2743 = vmatpush.bf16.msra.mxu0 %v2659
  %2744 = vmatpush.bf16.msra.mxu0 %v2658
  %2745 = vmatmul.bf16.gmra.mxu0 %v2437
  %v2746 = vpop.f32.mrf.mxu0
  %v2747 = vadd.f32 %v2734, %v2746
  %v2748 = vpop.f32.mrf.mxu0
  %2749 = vdwg.mxu0
  %v2750 = vlaneseq
  %v2751 = vand.u32 %v2750, 127
  %vm2752 = vcmp.ge.s32.totalorder %v2751, 4
  %vm2753 = vcmp.lt.s32.totalorder %v2751, 8
  %vm2754 = vmand %vm2752, %vm2753
  %v2755 = vmax.f32 %v2747, -20.0
  %v2756 = vmin.f32 %v2755, 2.0
  %v2757 = vmul.f32 %v2756, 1.442695
  %v2758 = vpow.pop %v2757
  %v2759 = vsel %vm2754, %v2758, %v2747
  %2760 = vst [vmem:[%s11] sm:$0xff] %v2759
  // Predicated region
  $region46: #{policy_network_forward.1} parent=0 // pred_check
    _
  $region47: #{policy_network_forward.1} parent=0 // pred_check_branch
    %2762 = sbr.rel (0) target = $region49
  $region48: #{policy_network_forward.1} parent=0 // pred_region
    _
  $region49: #{policy_network_forward.1} parent=0 // pred_fallthru
    _
  // Predicated region
  $region50: #{policy_network_forward.1} parent=0 // pred_check
    _
  $region51: #{policy_network_forward.1} parent=0 // pred_check_branch
    %2764 = sbr.rel (0) target = $region53
  $region52: #{policy_network_forward.1} parent=0 // pred_region
    _
  $region53: #{policy_network_forward.1} parent=0 // pred_fallthru
    _

</llo_original>
